<compile_context>
chip_gen: v6e
topology: v6e:2x2x1
jax: 0.10.0
libtpu: 0.0.40
codegen_flags: <defaults>
</compile_context>

<pallas_src>
import functools

import jax
import jax.numpy as jnp
from jax.experimental import pallas as pl
from jax.experimental.pallas import tpu as pltpu


def _hw_config():
    """Per-generation VMEM limit and tile targets."""
    try:
        kind = jax.devices()[0].device_kind.lower()
    except Exception:  # pragma: no cover - defensive
        kind = ""
    if "v7" in kind:       # 64 MiB VMEM per TC, 3.2 TB/s HBM
        return {"vmem": 40 * 2**20, "tm": 256, "tf": 512, "tq": 256, "tk": 256}
    if "v5" in kind or "v6" in kind:   # 128 MiB VMEM
        return {"vmem": 96 * 2**20, "tm": 512, "tf": 1024, "tq": 256, "tk": 512}
    return {"vmem": 32 * 2**20, "tm": 256, "tf": 512, "tq": 256, "tk": 256}


def _pick_tile(dim, target, align):
    """Largest divisor of `dim` that is <= target and a multiple of `align`.
    Falls back to the full dim (always a legal block, may be large)."""
    if dim <= target:
        return dim
    t = target - (target % align)
    while t >= align:
        if dim % t == 0:
            return t
        t -= align
    return dim  # TODO(synk): pad instead of falling back to a huge block.


# ------------------ fused attention block (QKV + flash + out_proj + LN1) -----

def _attn_block_kernel(qin_ref, kin_ref, vin_ref, xres_ref,
                       wq_ref, wk_ref, wv_ref, wo_ref, bqkv_ref, ln_ref,
                       o_ref,
                       q_sc, acc_sc, m_sc, l_sc, y_sc,
                       *, scale, eps):
    f32 = jnp.float32
    bf16 = jnp.bfloat16
    kv = pl.program_id(2)
    h = pl.program_id(3)
    last_kv = pl.num_programs(2) - 1
    last_h = pl.num_programs(3) - 1
    _, tq, hd = acc_sc.shape

    bh = bqkv_ref[h]  # (3, hd) f32 biases for this head: rows = q, k, v

    @pl.when((kv == 0) & (h == 0))
    def _():
        y_sc[...] = jnp.zeros_like(y_sc)   # out_proj accumulator for this q tile

    @pl.when(kv == 0)
    def _():
        # per-head q projection (bias + softmax scale folded in), cached over kv
        qh = jax.lax.dot_general(
            qin_ref[0], wq_ref[h],
            dimension_numbers=(((1,), (1,)), ((), ())),
            preferred_element_type=f32)
        q_sc[h] = ((qh + bh[0:1, :]) * scale).astype(q_sc.dtype)
        m_sc[h] = jnp.full((tq, 1), -jnp.inf, f32)
        l_sc[h] = jnp.zeros((tq, 1), f32)
        acc_sc[h] = jnp.zeros((tq, hd), f32)

    # project this K/V tile for this head on the fly (weights VMEM-resident)
    kh = jax.lax.dot_general(
        kin_ref[0], wk_ref[h],
        dimension_numbers=(((1,), (1,)), ((), ())),
        preferred_element_type=f32) + bh[1:2, :]
    vh = jax.lax.dot_general(
        vin_ref[0], wv_ref[h],
        dimension_numbers=(((1,), (1,)), ((), ())),
        preferred_element_type=f32) + bh[2:3, :]

    # online-softmax update for this (q tile, kv tile, head)
    s = jax.lax.dot_general(
        q_sc[h], kh.astype(bf16),
        dimension_numbers=(((1,), (1,)), ((), ())),
        preferred_element_type=f32)                      # (tq, tk)
    m_prev = m_sc[h]
    m_new = jnp.maximum(m_prev, jnp.max(s, axis=-1, keepdims=True))
    alpha = jnp.exp(m_prev - m_new)
    p = jnp.exp(s - m_new)
    l_sc[h] = alpha * l_sc[h] + jnp.sum(p, axis=-1, keepdims=True)
    acc_sc[h] = alpha * acc_sc[h] + jax.lax.dot_general(
        p.astype(bf16), vh.astype(bf16),
        dimension_numbers=(((1,), (0,)), ((), ())),
        preferred_element_type=f32)                      # (tq, hd)
    m_sc[h] = m_new

    @pl.when(kv == last_kv)
    def _():
        # fused out_proj: accumulate this head's contribution into (tq, E)
        o_h = acc_sc[h] * pl.reciprocal(l_sc[h], approx=True)
        y_sc[...] += jax.lax.dot_general(
            o_h.astype(bf16), wo_ref[h],
            dimension_numbers=(((1,), (0,)), ((), ())),
            preferred_element_type=f32)

    @pl.when((kv == last_kv) & (h == last_h))
    def _():
        # bias + residual + LayerNorm(norm1) epilogue, single lane-dense store
        y = y_sc[...] + ln_ref[0:1, :] + xres_ref[0].astype(f32)
        mu = jnp.mean(y, axis=-1, keepdims=True)
        var = jnp.mean(jnp.square(y - mu), axis=-1, keepdims=True)
        yn = (y - mu) * jax.lax.rsqrt(var + eps)
        o_ref[0] = (yn * ln_ref[1:2, :] + ln_ref[2:3, :]).astype(o_ref.dtype)


def attention_block(q_in, k_in, v_in, x_res, wq_h, wk_h, wv_h, wo_h, bqkv_h,
                    ln1, *, scale, eps=1e-5, tq=None, tk=None):
    # q_in: (N, Lq, E) bf16; k_in, v_in: (N, Lk, E) bf16; x_res: (N, Lq, E) f32
    # wq_h/wk_h/wv_h/wo_h: (H, hd, E) bf16; bqkv_h: (H, 3, hd) f32; ln1: (3, E) f32
    N, Lq, E = q_in.shape
    Lk = k_in.shape[1]
    H, hd, _ = wq_h.shape
    cfg = _hw_config()
    tq = tq if tq is not None else _pick_tile(Lq, cfg["tq"], 16)
    tk = tk if tk is not None else _pick_tile(Lk, cfg["tk"], 16)
    assert Lq % tq == 0 and Lk % tk == 0

    kernel = functools.partial(_attn_block_kernel, scale=scale, eps=eps)
    return pl.pallas_call(
        kernel,
        out_shape=jax.ShapeDtypeStruct((N, Lq, E), jnp.bfloat16),
        grid=(N, Lq // tq, Lk // tk, H),
        in_specs=[
            pl.BlockSpec((1, tq, E), lambda n, qi, kv, h: (n, qi, 0)),
            pl.BlockSpec((1, tk, E), lambda n, qi, kv, h: (n, kv, 0)),
            pl.BlockSpec((1, tk, E), lambda n, qi, kv, h: (n, kv, 0)),
            pl.BlockSpec((1, tq, E), lambda n, qi, kv, h: (n, qi, 0)),
            pl.BlockSpec((H, hd, E), lambda n, qi, kv, h: (0, 0, 0)),
            pl.BlockSpec((H, hd, E), lambda n, qi, kv, h: (0, 0, 0)),
            pl.BlockSpec((H, hd, E), lambda n, qi, kv, h: (0, 0, 0)),
            pl.BlockSpec((H, hd, E), lambda n, qi, kv, h: (0, 0, 0)),
            pl.BlockSpec((H, 3, hd), lambda n, qi, kv, h: (0, 0, 0)),
            pl.BlockSpec((3, E), lambda n, qi, kv, h: (0, 0)),
        ],
        out_specs=pl.BlockSpec((1, tq, E), lambda n, qi, kv, h: (n, qi, 0)),
        scratch_shapes=[
            pltpu.VMEM((H, tq, hd), jnp.bfloat16),   # scaled q per head
            pltpu.VMEM((H, tq, hd), jnp.float32),    # flash output accumulator
            pltpu.VMEM((H, tq, 1), jnp.float32),     # running max
            pltpu.VMEM((H, tq, 1), jnp.float32),     # running denominator
            pltpu.VMEM((tq, E), jnp.float32),        # fused out_proj accumulator
        ],
        compiler_params=pltpu.CompilerParams(
            dimension_semantics=("parallel", "parallel", "arbitrary", "arbitrary"),
            vmem_limit_bytes=cfg["vmem"]),
    )(q_in, k_in, v_in, x_res, wq_h, wk_h, wv_h, wo_h, bqkv_h, ln1)


# --------------- fused FFN block (linear1 + relu + linear2 + LN2) -------------

def _ffn_kernel(x_ref, w1_ref, b1_ref, w2_ref, b2_ref, g_ref, bb_ref,
                o_ref, acc_ref, *, eps):
    f32 = jnp.float32
    f = pl.program_id(1)

    @pl.when(f == 0)
    def _():
        acc_ref[...] = jnp.zeros_like(acc_ref)

    hidden = jax.lax.dot_general(
        x_ref[...], w1_ref[...],
        dimension_numbers=(((1,), (1,)), ((), ())),
        preferred_element_type=f32)
    hidden = jnp.maximum(hidden + b1_ref[...], 0.0)
    acc_ref[...] += jax.lax.dot_general(
        hidden.astype(jnp.bfloat16), w2_ref[...],
        dimension_numbers=(((1,), (1,)), ((), ())),
        preferred_element_type=f32)

    @pl.when(f == pl.num_programs(1) - 1)
    def _():
        y = acc_ref[...] + b2_ref[...] + x_ref[...].astype(f32)  # +bias +residual
        mu = jnp.mean(y, axis=-1, keepdims=True)
        var = jnp.mean(jnp.square(y - mu), axis=-1, keepdims=True)
        yn = (y - mu) * jax.lax.rsqrt(var + eps)
        o_ref[...] = (yn * g_ref[...] + bb_ref[...]).astype(o_ref.dtype)


def ffn_block(x, w1, b1, w2, b2, gamma, beta, *, eps=1e-5, tm=None, tf=None):
    # x: (M, E) bf16; w1: (F, E) bf16; w2: (E, F) bf16; vectors f32
    M, E = x.shape
    F = w1.shape[0]
    cfg = _hw_config()
    tm = tm if tm is not None else _pick_tile(M, cfg["tm"], 16)
    tf = tf if tf is not None else _pick_tile(F, cfg["tf"], 128)
    assert M % tm == 0 and F % tf == 0

    kernel = functools.partial(_ffn_kernel, eps=eps)
    return pl.pallas_call(
        kernel,
        out_shape=jax.ShapeDtypeStruct((M, E), jnp.float32),
        grid=(M // tm, F // tf),
        in_specs=[
            pl.BlockSpec((tm, E), lambda i, f: (i, 0)),
            pl.BlockSpec((tf, E), lambda i, f: (f, 0)),
            pl.BlockSpec((1, tf), lambda i, f: (0, f)),
            pl.BlockSpec((E, tf), lambda i, f: (0, f)),
            pl.BlockSpec((1, E), lambda i, f: (0, 0)),
            pl.BlockSpec((1, E), lambda i, f: (0, 0)),
            pl.BlockSpec((1, E), lambda i, f: (0, 0)),
        ],
        out_specs=pl.BlockSpec((tm, E), lambda i, f: (i, 0)),
        scratch_shapes=[pltpu.VMEM((tm, E), jnp.float32)],
        compiler_params=pltpu.CompilerParams(
            dimension_semantics=("parallel", "arbitrary"),
            vmem_limit_bytes=cfg["vmem"]),
    )(x, w1, b1.reshape(1, F).astype(jnp.float32), w2,
      b2.reshape(1, E).astype(jnp.float32),
      gamma.reshape(1, E).astype(jnp.float32),
      beta.reshape(1, E).astype(jnp.float32))


# ----------------------------- T_D_Layer forward ------------------------------

def t_d_layer_forward(x, memory, params, nhead, pos=None, query_pos=None,
                      tq=None, tk=None, tm=None, tf=None):
    """x: (Lq, N, E), memory: (Lk, N, E). Returns (Lq, N, E). Eval semantics."""
    Lq, N, E = x.shape
    assert E % nhead == 0
    hd = E // nhead
    scale = 1.0 / float(hd) ** 0.5
    bf16 = jnp.bfloat16

    # Batch-major working layout (N, L, E); pos-embedding adds + bf16 casts fuse
    # with the transposes in XLA.
    q_in = (x if query_pos is None else x + query_pos).transpose(1, 0, 2).astype(bf16)
    k_in = (memory if pos is None else memory + pos).transpose(1, 0, 2).astype(bf16)
    v_in = memory.transpose(1, 0, 2).astype(bf16)
    x_res = x.transpose(1, 0, 2)  # f32 residual for norm1 precision

    # Per-head weight / bias layouts (trace-time reshapes of small params).
    wq_h = params["in_proj_w"][:E].reshape(nhead, hd, E).astype(bf16)
    wk_h = params["in_proj_w"][E:2 * E].reshape(nhead, hd, E).astype(bf16)
    wv_h = params["in_proj_w"][2 * E:].reshape(nhead, hd, E).astype(bf16)
    wo_h = params["out_proj_w"].T.reshape(nhead, hd, E).astype(bf16)
    bqkv_h = params["in_proj_b"].reshape(3, nhead, hd).transpose(1, 0, 2).astype(jnp.float32)
    ln1 = jnp.stack([params["out_proj_b"], params["norm1_g"],
                     params["norm1_b"]]).astype(jnp.float32)

    # Fused: QKV proj + flash attention + out_proj + residual + norm1.
    x1 = attention_block(q_in, k_in, v_in, x_res, wq_h, wk_h, wv_h, wo_h,
                         bqkv_h, ln1, scale=scale, tq=tq, tk=tk)   # (N, Lq, E) bf16

    # Fused FFN: linear1 + relu + linear2 + residual + norm2.
    out = ffn_block(x1.reshape(N * Lq, E),
                    params["linear1_w"].astype(bf16), params["linear1_b"],
                    params["linear2_w"].astype(bf16), params["linear2_b"],
                    params["norm2_g"], params["norm2_b"], tm=tm, tf=tf)

    return out.reshape(N, Lq, E).transpose(1, 0, 2).astype(x.dtype)


# ------------------------------ pure-JAX reference ----------------------------

def _reference_forward(x, memory, params, nhead, pos, query_pos):
    Lq, N, E = x.shape
    Lk = memory.shape[0]
    hd = E // nhead
    scale = 1.0 / (hd ** 0.5)

    def lin(t, w, b):
        return t @ w.T + b

    def ln(t, g, b, eps=1e-5):
        mu = t.mean(-1, keepdims=True)
        var = ((t - mu) ** 2).mean(-1, keepdims=True)
        return (t - mu) / jnp.sqrt(var + eps) * g + b

    q = lin(x + query_pos, params["in_proj_w"][:E], params["in_proj_b"][:E])
    k = lin(memory + pos, params["in_proj_w"][E:2 * E], params["in_proj_b"][E:2 * E])
    v = lin(memory, params["in_proj_w"][2 * E:], params["in_proj_b"][2 * E:])

    def heads(t, L):  # (L, N, E) -> (N, H, L, hd)
        return t.reshape(L, N, nhead, hd).transpose(1, 2, 0, 3)

    qh, kh, vh = heads(q, Lq), heads(k, Lk), heads(v, Lk)
    s = jnp.einsum("nhqd,nhkd->nhqk", qh * scale, kh)
    p = jax.nn.softmax(s, axis=-1)
    o = jnp.einsum("nhqk,nhkd->nhqd", p, vh)
    o = o.transpose(2, 0, 1, 3).reshape(Lq, N, E)
    x2 = lin(o, params["out_proj_w"], params["out_proj_b"])
    x1 = ln(x + x2, params["norm1_g"], params["norm1_b"])
    hmid = jnp.maximum(lin(x1, params["linear1_w"], params["linear1_b"]), 0.0)
    x2b = lin(hmid, params["linear2_w"], params["linear2_b"])
    return ln(x1 + x2b, params["norm2_g"], params["norm2_b"])


# ----------------------------------- main --------------------------------------

def make_params(key, emb_dim, nhead, dim_forward, dtype=jnp.float32):
    ks = jax.random.split(key, 8)
    s = 0.05
    return {
        "in_proj_w": s * jax.random.normal(ks[0], (3 * emb_dim, emb_dim), dtype),
        "in_proj_b": s * jax.random.normal(ks[1], (3 * emb_dim,), dtype),
        "out_proj_w": s * jax.random.normal(ks[2], (emb_dim, emb_dim), dtype),
        "out_proj_b": s * jax.random.normal(ks[3], (emb_dim,), dtype),
        "linear1_w": s * jax.random.normal(ks[4], (dim_forward, emb_dim), dtype),
        "linear1_b": s * jax.random.normal(ks[5], (dim_forward,), dtype),
        "linear2_w": s * jax.random.normal(ks[6], (emb_dim, dim_forward), dtype),
        "linear2_b": s * jax.random.normal(ks[7], (emb_dim,), dtype),
        "norm1_g": jnp.ones((emb_dim,), dtype),
        "norm1_b": jnp.zeros((emb_dim,), dtype),
        "norm2_g": jnp.ones((emb_dim,), dtype),
        "norm2_b": jnp.zeros((emb_dim,), dtype),
    }


if __name__ == "__main__":
    emb_dim, nhead, dim_forward = 32, 4, 256
    Lq, Lk, N = 32, 32, 2

    key = jax.random.PRNGKey(0)
    kx, km, kp, kqp, kparams = jax.random.split(key, 5)

    x = jax.random.normal(kx, (Lq, N, emb_dim), jnp.float32)
    memory = jax.random.normal(km, (Lk, N, emb_dim), jnp.float32)
    pos = jax.random.normal(kp, (Lk, N, emb_dim), jnp.float32)
    query_pos = jax.random.normal(kqp, (Lq, N, emb_dim), jnp.float32)
    params = make_params(kparams, emb_dim, nhead, dim_forward)

    # Small tile overrides so these toy shapes still exercise the multi-tile
    # flash-softmax / head-accumulation / FFN-reduction paths (production sizes
    # use the auto-picked, generation-aware tiles).
    fwd = jax.jit(functools.partial(t_d_layer_forward, nhead=nhead,
                                    tq=16, tk=16, tm=32, tf=128))
    out = fwd(x, memory, params, pos=pos, query_pos=query_pos)
    jax.block_until_ready(out)

    ref = _reference_forward(x, memory, params, nhead, pos, query_pos)

    assert out.shape == (Lq, N, emb_dim)
    assert bool(jnp.all(jnp.isfinite(out)))
    max_err = float(jnp.max(jnp.abs(out - ref)))
    # bf16 MXU operands (f32 accumulation) -> small relative error vs f32 ref.
    assert bool(jnp.allclose(out, ref, atol=2e-2, rtol=2e-2)), max_err
    print("KERNEL_OK")
</pallas_src>

<mosaic_0001>
module attributes {stable_mosaic.version = 11 : i64} {
  func.func @_attn_block_kernel(%arg0: i32, %arg1: i32, %arg2: i32, %arg3: i32, %arg4: memref<1x16x32xbf16, #tpu.memory_space<vmem>>, %arg5: memref<1x16x32xbf16, #tpu.memory_space<vmem>>, %arg6: memref<1x16x32xbf16, #tpu.memory_space<vmem>>, %arg7: memref<1x16x32xf32, #tpu.memory_space<vmem>>, %arg8: memref<4x8x32xbf16, #tpu.memory_space<vmem>>, %arg9: memref<4x8x32xbf16, #tpu.memory_space<vmem>>, %arg10: memref<4x8x32xbf16, #tpu.memory_space<vmem>>, %arg11: memref<4x8x32xbf16, #tpu.memory_space<vmem>>, %arg12: memref<4x3x8xf32, #tpu.memory_space<vmem>>, %arg13: memref<3x32xf32, #tpu.memory_space<vmem>>, %arg14: memref<1x16x32xbf16, #tpu.memory_space<vmem>>, %arg15: memref<4x16x8xbf16, #tpu.memory_space<vmem>>, %arg16: memref<4x16x8xf32, #tpu.memory_space<vmem>>, %arg17: memref<4x16x1xf32, #tpu.memory_space<vmem>>, %arg18: memref<4x16x1xf32, #tpu.memory_space<vmem>>, %arg19: memref<16x32xf32, #tpu.memory_space<vmem>>) attributes {dimension_semantics = [#tpu.dimension_semantics<parallel>, #tpu.dimension_semantics<parallel>, #tpu.dimension_semantics<arbitrary>, #tpu.dimension_semantics<arbitrary>], iteration_bounds = array<i64: 2, 2, 2, 4>, scalar_prefetch = 0 : i64, scratch_operands = 5 : i64, tpu.core_type = #tpu.core_type<tc>, window_params = [{transform_indices = @transform_0, window_bounds = array<i64: 1, 16, 32>}, {transform_indices = @transform_1, window_bounds = array<i64: 1, 16, 32>}, {transform_indices = @transform_2, window_bounds = array<i64: 1, 16, 32>}, {transform_indices = @transform_3, window_bounds = array<i64: 1, 16, 32>}, {pipeline_mode = #tpu.pipeline_mode<synchronous>, transform_indices = @transform_4, window_bounds = array<i64: 4, 8, 32>}, {pipeline_mode = #tpu.pipeline_mode<synchronous>, transform_indices = @transform_5, window_bounds = array<i64: 4, 8, 32>}, {pipeline_mode = #tpu.pipeline_mode<synchronous>, transform_indices = @transform_6, window_bounds = array<i64: 4, 8, 32>}, {pipeline_mode = #tpu.pipeline_mode<synchronous>, transform_indices = @transform_7, window_bounds = array<i64: 4, 8, 32>}, {pipeline_mode = #tpu.pipeline_mode<synchronous>, transform_indices = @transform_8, window_bounds = array<i64: 4, 3, 8>}, {pipeline_mode = #tpu.pipeline_mode<synchronous>, transform_indices = @transform_9, window_bounds = array<i64: 3, 32>}, {transform_indices = @transform_10, window_bounds = array<i64: 1, 16, 32>}]} {
    %0 = arith.index_cast %arg3 : i32 to index
    %c0 = arith.constant 0 : index
    %c0_0 = arith.constant 0 : index
    %1 = vector.load %arg12[%0, %c0, %c0_0] : memref<4x3x8xf32, #tpu.memory_space<vmem>>, vector<1x3x8xf32>
    %2 = vector.shape_cast %1 : vector<1x3x8xf32> to vector<3x8xf32>
    %c0_i32 = arith.constant 0 : i32
    %3 = arith.cmpi eq, %arg2, %c0_i32 : i32
    %c0_i32_1 = arith.constant 0 : i32
    %4 = arith.cmpi eq, %arg3, %c0_i32_1 : i32
    %5 = arith.andi %3, %4 : i1
    %6 = arith.extui %5 : i1 to i32
    %c0_i32_2 = arith.constant 0 : i32
    %7 = arith.cmpi ne, %6, %c0_i32_2 : i32
    scf.if %7 {
      %cst_37 = arith.constant 0.000000e+00 : f32
      %81 = vector.broadcast %cst_37 : f32 to vector<16x32xf32>
      %c0_38 = arith.constant 0 : index
      %c0_39 = arith.constant 0 : index
      %82 = vector.load %arg19[%c0_38, %c0_39] : memref<16x32xf32, #tpu.memory_space<vmem>>, vector<16x32xf32>
      tpu.vector_store %arg19[%c0_38, %c0_39], %81 {strides = array<i32>} : memref<16x32xf32, #tpu.memory_space<vmem>>, vector<16x32xf32>,
    } else {
    }
    %c0_i32_3 = arith.constant 0 : i32
    %8 = arith.cmpi eq, %arg2, %c0_i32_3 : i32
    %9 = arith.extui %8 : i1 to i32
    %c0_i32_4 = arith.constant 0 : i32
    %10 = arith.cmpi ne, %9, %c0_i32_4 : i32
    scf.if %10 {
      %c0_37 = arith.constant 0 : index
      %c0_38 = arith.constant 0 : index
      %c0_39 = arith.constant 0 : index
      %81 = vector.load %arg4[%c0_37, %c0_38, %c0_39] : memref<1x16x32xbf16, #tpu.memory_space<vmem>>, vector<1x16x32xbf16>
      %82 = vector.shape_cast %81 : vector<1x16x32xbf16> to vector<16x32xbf16>
      %83 = arith.index_cast %arg3 : i32 to index
      %c0_40 = arith.constant 0 : index
      %c0_41 = arith.constant 0 : index
      %84 = vector.load %arg8[%83, %c0_40, %c0_41] : memref<4x8x32xbf16, #tpu.memory_space<vmem>>, vector<1x8x32xbf16>
      %85 = vector.shape_cast %84 : vector<1x8x32xbf16> to vector<8x32xbf16>
      %cst_42 = arith.constant dense<0.000000e+00> : vector<16x8xf32>
      %86 = tpu.matmul %82, %85, %cst_42 {dimension_numbers = #tpu.dot_dimension_numbers<[1], [1], [0], [0], [0, 0, 1, 0], [], []>} : vector<16x32xbf16>, vector<8x32xbf16>, vector<16x8xf32> -> vector<16x8xf32>
      %87 = vector.extract_strided_slice %2 {offsets = [0, 0], sizes = [1, 8], strides = [1, 1]} : vector<3x8xf32> to vector<1x8xf32>
      %88 = vector.broadcast %87 : vector<1x8xf32> to vector<16x8xf32>
      %89 = arith.addf %86, %88 : vector<16x8xf32>
      %cst_43 = arith.constant 0.353553385 : f32
      %90 = vector.broadcast %cst_43 : f32 to vector<16x8xf32>
      %91 = arith.mulf %89, %90 : vector<16x8xf32>
      %92 = arith.truncf %91 : vector<16x8xf32> to vector<16x8xbf16>
      %93 = arith.index_cast %arg3 : i32 to index
      %c0_44 = arith.constant 0 : index
      %c0_45 = arith.constant 0 : index
      %94 = vector.load %arg15[%93, %c0_44, %c0_45] : memref<4x16x8xbf16, #tpu.memory_space<vmem>>, vector<1x16x8xbf16>
      %95 = vector.shape_cast %94 : vector<1x16x8xbf16> to vector<16x8xbf16>
      %96 = vector.shape_cast %92 : vector<16x8xbf16> to vector<1x16x8xbf16>
      tpu.vector_store %arg15[%93, %c0_44, %c0_45], %96 {strides = array<i32>} : memref<4x16x8xbf16, #tpu.memory_space<vmem>>, vector<1x16x8xbf16>,
      %cst_46 = arith.constant 0xFF800000 : f32
      %97 = vector.broadcast %cst_46 : f32 to vector<16x1xf32>
      %98 = arith.index_cast %arg3 : i32 to index
      %c0_47 = arith.constant 0 : index
      %c0_48 = arith.constant 0 : index
      %99 = vector.load %arg17[%98, %c0_47, %c0_48] : memref<4x16x1xf32, #tpu.memory_space<vmem>>, vector<1x16x1xf32>
      %100 = vector.shape_cast %99 : vector<1x16x1xf32> to vector<16x1xf32>
      %101 = vector.shape_cast %97 : vector<16x1xf32> to vector<1x16x1xf32>
      tpu.vector_store %arg17[%98, %c0_47, %c0_48], %101 {strides = array<i32>} : memref<4x16x1xf32, #tpu.memory_space<vmem>>, vector<1x16x1xf32>,
      %cst_49 = arith.constant 0.000000e+00 : f32
      %102 = vector.broadcast %cst_49 : f32 to vector<16x1xf32>
      %103 = arith.index_cast %arg3 : i32 to index
      %c0_50 = arith.constant 0 : index
      %c0_51 = arith.constant 0 : index
      %104 = vector.load %arg18[%103, %c0_50, %c0_51] : memref<4x16x1xf32, #tpu.memory_space<vmem>>, vector<1x16x1xf32>
      %105 = vector.shape_cast %104 : vector<1x16x1xf32> to vector<16x1xf32>
      %106 = vector.shape_cast %102 : vector<16x1xf32> to vector<1x16x1xf32>
      tpu.vector_store %arg18[%103, %c0_50, %c0_51], %106 {strides = array<i32>} : memref<4x16x1xf32, #tpu.memory_space<vmem>>, vector<1x16x1xf32>,
      %cst_52 = arith.constant 0.000000e+00 : f32
      %107 = vector.broadcast %cst_52 : f32 to vector<16x8xf32>
      %108 = arith.index_cast %arg3 : i32 to index
      %c0_53 = arith.constant 0 : index
      %c0_54 = arith.constant 0 : index
      %109 = vector.load %arg16[%108, %c0_53, %c0_54] : memref<4x16x8xf32, #tpu.memory_space<vmem>>, vector<1x16x8xf32>
      %110 = vector.shape_cast %109 : vector<1x16x8xf32> to vector<16x8xf32>
      %111 = vector.shape_cast %107 : vector<16x8xf32> to vector<1x16x8xf32>
      tpu.vector_store %arg16[%108, %c0_53, %c0_54], %111 {strides = array<i32>} : memref<4x16x8xf32, #tpu.memory_space<vmem>>, vector<1x16x8xf32>,
    } else {
    }
    %c0_5 = arith.constant 0 : index
    %c0_6 = arith.constant 0 : index
    %c0_7 = arith.constant 0 : index
    %11 = vector.load %arg5[%c0_5, %c0_6, %c0_7] : memref<1x16x32xbf16, #tpu.memory_space<vmem>>, vector<1x16x32xbf16>
    %12 = vector.shape_cast %11 : vector<1x16x32xbf16> to vector<16x32xbf16>
    %13 = arith.index_cast %arg3 : i32 to index
    %c0_8 = arith.constant 0 : index
    %c0_9 = arith.constant 0 : index
    %14 = vector.load %arg9[%13, %c0_8, %c0_9] : memref<4x8x32xbf16, #tpu.memory_space<vmem>>, vector<1x8x32xbf16>
    %15 = vector.shape_cast %14 : vector<1x8x32xbf16> to vector<8x32xbf16>
    %cst = arith.constant dense<0.000000e+00> : vector<16x8xf32>
    %16 = tpu.matmul %12, %15, %cst {dimension_numbers = #tpu.dot_dimension_numbers<[1], [1], [0], [0], [0, 0, 1, 0], [], []>} : vector<16x32xbf16>, vector<8x32xbf16>, vector<16x8xf32> -> vector<16x8xf32>
    %17 = vector.extract_strided_slice %2 {offsets = [1, 0], sizes = [1, 8], strides = [1, 1]} : vector<3x8xf32> to vector<1x8xf32>
    %18 = vector.broadcast %17 : vector<1x8xf32> to vector<16x8xf32>
    %19 = arith.addf %16, %18 : vector<16x8xf32>
    %c0_10 = arith.constant 0 : index
    %c0_11 = arith.constant 0 : index
    %c0_12 = arith.constant 0 : index
    %20 = vector.load %arg6[%c0_10, %c0_11, %c0_12] : memref<1x16x32xbf16, #tpu.memory_space<vmem>>, vector<1x16x32xbf16>
    %21 = vector.shape_cast %20 : vector<1x16x32xbf16> to vector<16x32xbf16>
    %22 = arith.index_cast %arg3 : i32 to index
    %c0_13 = arith.constant 0 : index
    %c0_14 = arith.constant 0 : index
    %23 = vector.load %arg10[%22, %c0_13, %c0_14] : memref<4x8x32xbf16, #tpu.memory_space<vmem>>, vector<1x8x32xbf16>
    %24 = vector.shape_cast %23 : vector<1x8x32xbf16> to vector<8x32xbf16>
    %cst_15 = arith.constant dense<0.000000e+00> : vector<16x8xf32>
    %25 = tpu.matmul %21, %24, %cst_15 {dimension_numbers = #tpu.dot_dimension_numbers<[1], [1], [0], [0], [0, 0, 1, 0], [], []>} : vector<16x32xbf16>, vector<8x32xbf16>, vector<16x8xf32> -> vector<16x8xf32>
    %26 = vector.extract_strided_slice %2 {offsets = [2, 0], sizes = [1, 8], strides = [1, 1]} : vector<3x8xf32> to vector<1x8xf32>
    %27 = vector.broadcast %26 : vector<1x8xf32> to vector<16x8xf32>
    %28 = arith.addf %25, %27 : vector<16x8xf32>
    %29 = arith.index_cast %arg3 : i32 to index
    %c0_16 = arith.constant 0 : index
    %c0_17 = arith.constant 0 : index
    %30 = vector.load %arg15[%29, %c0_16, %c0_17] : memref<4x16x8xbf16, #tpu.memory_space<vmem>>, vector<1x16x8xbf16>
    %31 = vector.shape_cast %30 : vector<1x16x8xbf16> to vector<16x8xbf16>
    %32 = arith.truncf %19 : vector<16x8xf32> to vector<16x8xbf16>
    %cst_18 = arith.constant dense<0.000000e+00> : vector<16x16xf32>
    %33 = tpu.matmul %31, %32, %cst_18 {dimension_numbers = #tpu.dot_dimension_numbers<[1], [1], [0], [0], [0, 0, 1, 0], [], []>} : vector<16x8xbf16>, vector<16x8xbf16>, vector<16x16xf32> -> vector<16x16xf32>
    %34 = arith.index_cast %arg3 : i32 to index
    %c0_19 = arith.constant 0 : index
    %c0_20 = arith.constant 0 : index
    %35 = vector.load %arg17[%34, %c0_19, %c0_20] : memref<4x16x1xf32, #tpu.memory_space<vmem>>, vector<1x16x1xf32>
    %36 = vector.shape_cast %35 : vector<1x16x1xf32> to vector<16x1xf32>
    %cst_21 = arith.constant dense<0xFF800000> : vector<16xf32>
    %37 = vector.multi_reduction <maximumf>, %33, %cst_21 [1] : vector<16x16xf32> to vector<16xf32>
    %38 = vector.shape_cast %37 : vector<16xf32> to vector<16x1xf32>
    %39 = arith.maximumf %36, %38 : vector<16x1xf32>
    %40 = arith.subf %36, %39 : vector<16x1xf32>
    %41 = math.exp %40 : vector<16x1xf32>
    %42 = vector.broadcast %39 : vector<16x1xf32> to vector<16x16xf32>
    %43 = arith.subf %33, %42 : vector<16x16xf32>
    %44 = math.exp %43 : vector<16x16xf32>
    %45 = arith.index_cast %arg3 : i32 to index
    %c0_22 = arith.constant 0 : index
    %c0_23 = arith.constant 0 : index
    %46 = vector.load %arg18[%45, %c0_22, %c0_23] : memref<4x16x1xf32, #tpu.memory_space<vmem>>, vector<1x16x1xf32>
    %47 = vector.shape_cast %46 : vector<1x16x1xf32> to vector<16x1xf32>
    %48 = arith.mulf %41, %47 : vector<16x1xf32>
    %cst_24 = arith.constant dense<0.000000e+00> : vector<16xf32>
    %49 = vector.multi_reduction <add>, %44, %cst_24 [1] : vector<16x16xf32> to vector<16xf32>
    %50 = vector.shape_cast %49 : vector<16xf32> to vector<16x1xf32>
    %51 = arith.addf %48, %50 : vector<16x1xf32>
    %52 = arith.index_cast %arg3 : i32 to index
    %c0_25 = arith.constant 0 : index
    %c0_26 = arith.constant 0 : index
    %53 = vector.load %arg18[%52, %c0_25, %c0_26] : memref<4x16x1xf32, #tpu.memory_space<vmem>>, vector<1x16x1xf32>
    %54 = vector.shape_cast %53 : vector<1x16x1xf32> to vector<16x1xf32>
    %55 = vector.shape_cast %51 : vector<16x1xf32> to vector<1x16x1xf32>
    tpu.vector_store %arg18[%52, %c0_25, %c0_26], %55 {strides = array<i32>} : memref<4x16x1xf32, #tpu.memory_space<vmem>>, vector<1x16x1xf32>,
    %56 = arith.index_cast %arg3 : i32 to index
    %c0_27 = arith.constant 0 : index
    %c0_28 = arith.constant 0 : index
    %57 = vector.load %arg16[%56, %c0_27, %c0_28] : memref<4x16x8xf32, #tpu.memory_space<vmem>>, vector<1x16x8xf32>
    %58 = vector.shape_cast %57 : vector<1x16x8xf32> to vector<16x8xf32>
    %59 = vector.broadcast %41 : vector<16x1xf32> to vector<16x8xf32>
    %60 = arith.mulf %59, %58 : vector<16x8xf32>
    %61 = arith.truncf %44 : vector<16x16xf32> to vector<16x16xbf16>
    %62 = arith.truncf %28 : vector<16x8xf32> to vector<16x8xbf16>
    %cst_29 = arith.constant dense<0.000000e+00> : vector<16x8xf32>
    %63 = tpu.matmul %61, %62, %cst_29 {dimension_numbers = #tpu.dot_dimension_numbers<[1], [0], [0], [1], [0, 0, 1, 1], [], []>} : vector<16x16xbf16>, vector<16x8xbf16>, vector<16x8xf32> -> vector<16x8xf32>
    %64 = arith.addf %60, %63 : vector<16x8xf32>
    %65 = arith.index_cast %arg3 : i32 to index
    %c0_30 = arith.constant 0 : index
    %c0_31 = arith.constant 0 : index
    %66 = vector.load %arg16[%65, %c0_30, %c0_31] : memref<4x16x8xf32, #tpu.memory_space<vmem>>, vector<1x16x8xf32>
    %67 = vector.shape_cast %66 : vector<1x16x8xf32> to vector<16x8xf32>
    %68 = vector.shape_cast %64 : vector<16x8xf32> to vector<1x16x8xf32>
    tpu.vector_store %arg16[%65, %c0_30, %c0_31], %68 {strides = array<i32>} : memref<4x16x8xf32, #tpu.memory_space<vmem>>, vector<1x16x8xf32>,
    %69 = arith.index_cast %arg3 : i32 to index
    %c0_32 = arith.constant 0 : index
    %c0_33 = arith.constant 0 : index
    %70 = vector.load %arg17[%69, %c0_32, %c0_33] : memref<4x16x1xf32, #tpu.memory_space<vmem>>, vector<1x16x1xf32>
    %71 = vector.shape_cast %70 : vector<1x16x1xf32> to vector<16x1xf32>
    %72 = vector.shape_cast %39 : vector<16x1xf32> to vector<1x16x1xf32>
    tpu.vector_store %arg17[%69, %c0_32, %c0_33], %72 {strides = array<i32>} : memref<4x16x1xf32, #tpu.memory_space<vmem>>, vector<1x16x1xf32>,
    %c1_i32 = arith.constant 1 : i32
    %73 = arith.cmpi eq, %arg2, %c1_i32 : i32
    %74 = arith.extui %73 : i1 to i32
    %c0_i32_34 = arith.constant 0 : i32
    %75 = arith.cmpi ne, %74, %c0_i32_34 : i32
    scf.if %75 {
      %81 = arith.index_cast %arg3 : i32 to index
      %c0_37 = arith.constant 0 : index
      %c0_38 = arith.constant 0 : index
      %82 = vector.load %arg16[%81, %c0_37, %c0_38] : memref<4x16x8xf32, #tpu.memory_space<vmem>>, vector<1x16x8xf32>
      %83 = vector.shape_cast %82 : vector<1x16x8xf32> to vector<16x8xf32>
      %84 = arith.index_cast %arg3 : i32 to index
      %c0_39 = arith.constant 0 : index
      %c0_40 = arith.constant 0 : index
      %85 = vector.load %arg18[%84, %c0_39, %c0_40] : memref<4x16x1xf32, #tpu.memory_space<vmem>>, vector<1x16x1xf32>
      %86 = vector.shape_cast %85 : vector<1x16x1xf32> to vector<16x1xf32>
      %87 = tpu.reciprocal %86 {approx = true} : vector<16x1xf32> -> vector<16x1xf32>
      %88 = vector.broadcast %87 : vector<16x1xf32> to vector<16x8xf32>
      %89 = arith.mulf %83, %88 : vector<16x8xf32>
      %c0_41 = arith.constant 0 : index
      %c0_42 = arith.constant 0 : index
      %90 = vector.load %arg19[%c0_41, %c0_42] : memref<16x32xf32, #tpu.memory_space<vmem>>, vector<16x32xf32>
      %91 = arith.truncf %89 : vector<16x8xf32> to vector<16x8xbf16>
      %92 = arith.index_cast %arg3 : i32 to index
      %c0_43 = arith.constant 0 : index
      %c0_44 = arith.constant 0 : index
      %93 = vector.load %arg11[%92, %c0_43, %c0_44] : memref<4x8x32xbf16, #tpu.memory_space<vmem>>, vector<1x8x32xbf16>
      %94 = vector.shape_cast %93 : vector<1x8x32xbf16> to vector<8x32xbf16>
      %cst_45 = arith.constant dense<0.000000e+00> : vector<16x32xf32>
      %95 = tpu.matmul %91, %94, %cst_45 {dimension_numbers = #tpu.dot_dimension_numbers<[1], [0], [0], [1], [0, 0, 1, 1], [], []>} : vector<16x8xbf16>, vector<8x32xbf16>, vector<16x32xf32> -> vector<16x32xf32>
      %96 = arith.addf %90, %95 : vector<16x32xf32>
      %c0_46 = arith.constant 0 : index
      %c0_47 = arith.constant 0 : index
      %97 = vector.load %arg19[%c0_46, %c0_47] : memref<16x32xf32, #tpu.memory_space<vmem>>, vector<16x32xf32>
      tpu.vector_store %arg19[%c0_46, %c0_47], %96 {strides = array<i32>} : memref<16x32xf32, #tpu.memory_space<vmem>>, vector<16x32xf32>,
    } else {
    }
    %c1_i32_35 = arith.constant 1 : i32
    %76 = arith.cmpi eq, %arg2, %c1_i32_35 : i32
    %c3_i32 = arith.constant 3 : i32
    %77 = arith.cmpi eq, %arg3, %c3_i32 : i32
    %78 = arith.andi %76, %77 : i1
    %79 = arith.extui %78 : i1 to i32
    %c0_i32_36 = arith.constant 0 : i32
    %80 = arith.cmpi ne, %79, %c0_i32_36 : i32
    scf.if %80 {
      %c0_37 = arith.constant 0 : index
      %c0_38 = arith.constant 0 : index
      %81 = vector.load %arg19[%c0_37, %c0_38] : memref<16x32xf32, #tpu.memory_space<vmem>>, vector<16x32xf32>
      %c0_39 = arith.constant 0 : index
      %c0_40 = arith.constant 0 : index
      %82 = vector.load %arg13[%c0_39, %c0_40] : memref<3x32xf32, #tpu.memory_space<vmem>>, vector<1x32xf32>
      %83 = vector.broadcast %82 : vector<1x32xf32> to vector<16x32xf32>
      %84 = arith.addf %81, %83 : vector<16x32xf32>
      %c0_41 = arith.constant 0 : index
      %c0_42 = arith.constant 0 : index
      %c0_43 = arith.constant 0 : index
      %85 = vector.load %arg7[%c0_41, %c0_42, %c0_43] : memref<1x16x32xf32, #tpu.memory_space<vmem>>, vector<1x16x32xf32>
      %86 = vector.shape_cast %85 : vector<1x16x32xf32> to vector<16x32xf32>
      %87 = arith.addf %84, %86 : vector<16x32xf32>
      %cst_44 = arith.constant dense<0.000000e+00> : vector<16xf32>
      %88 = vector.multi_reduction <add>, %87, %cst_44 [1] : vector<16x32xf32> to vector<16xf32>
      %89 = vector.shape_cast %88 : vector<16xf32> to vector<16x1xf32>
      %cst_45 = arith.constant 3.200000e+01 : f32
      %90 = vector.broadcast %cst_45 : f32 to vector<16x1xf32>
      %91 = arith.divf %89, %90 : vector<16x1xf32>
      %92 = vector.broadcast %91 : vector<16x1xf32> to vector<16x32xf32>
      %93 = arith.subf %87, %92 : vector<16x32xf32>
      %94 = arith.mulf %93, %93 : vector<16x32xf32>
      %cst_46 = arith.constant dense<0.000000e+00> : vector<16xf32>
      %95 = vector.multi_reduction <add>, %94, %cst_46 [1] : vector<16x32xf32> to vector<16xf32>
      %96 = vector.shape_cast %95 : vector<16xf32> to vector<16x1xf32>
      %cst_47 = arith.constant 3.200000e+01 : f32
      %97 = vector.broadcast %cst_47 : f32 to vector<16x1xf32>
      %98 = arith.divf %96, %97 : vector<16x1xf32>
      %99 = vector.broadcast %91 : vector<16x1xf32> to vector<16x32xf32>
      %100 = arith.subf %87, %99 : vector<16x32xf32>
      %cst_48 = arith.constant 9.99999974E-6 : f32
      %101 = vector.broadcast %cst_48 : f32 to vector<16x1xf32>
      %102 = arith.addf %98, %101 : vector<16x1xf32>
      %103 = math.rsqrt %102 : vector<16x1xf32>
      %104 = vector.broadcast %103 : vector<16x1xf32> to vector<16x32xf32>
      %105 = arith.mulf %100, %104 : vector<16x32xf32>
      %c1 = arith.constant 1 : index
      %c0_49 = arith.constant 0 : index
      %106 = vector.load %arg13[%c1, %c0_49] : memref<3x32xf32, #tpu.memory_space<vmem>>, vector<1x32xf32>
      %107 = vector.broadcast %106 : vector<1x32xf32> to vector<16x32xf32>
      %108 = arith.mulf %105, %107 : vector<16x32xf32>
      %c2 = arith.constant 2 : index
      %c0_50 = arith.constant 0 : index
      %109 = vector.load %arg13[%c2, %c0_50] : memref<3x32xf32, #tpu.memory_space<vmem>>, vector<1x32xf32>
      %110 = vector.broadcast %109 : vector<1x32xf32> to vector<16x32xf32>
      %111 = arith.addf %108, %110 : vector<16x32xf32>
      %112 = arith.truncf %111 : vector<16x32xf32> to vector<16x32xbf16>
      %c0_51 = arith.constant 0 : index
      %c0_52 = arith.constant 0 : index
      %c0_53 = arith.constant 0 : index
      %113 = vector.load %arg14[%c0_51, %c0_52, %c0_53] : memref<1x16x32xbf16, #tpu.memory_space<vmem>>, vector<1x16x32xbf16>
      %114 = vector.shape_cast %113 : vector<1x16x32xbf16> to vector<16x32xbf16>
      %115 = vector.shape_cast %112 : vector<16x32xbf16> to vector<1x16x32xbf16>
      tpu.vector_store %arg14[%c0_51, %c0_52, %c0_53], %115 {strides = array<i32>} : memref<1x16x32xbf16, #tpu.memory_space<vmem>>, vector<1x16x32xbf16>,
    } else {
    }
    return
  }
  func.func @transform_0(%arg0: i32, %arg1: i32, %arg2: i32, %arg3: i32) -> (i32, i32, i32) {
    %c0_i32 = arith.constant 0 : i32
    %c0_i32_0 = arith.constant 0 : i32
    return %arg0, %arg1, %c0_i32 : i32, i32, i32
  }
  func.func @transform_1(%arg0: i32, %arg1: i32, %arg2: i32, %arg3: i32) -> (i32, i32, i32) {
    %c0_i32 = arith.constant 0 : i32
    %c0_i32_0 = arith.constant 0 : i32
    return %arg0, %arg2, %c0_i32 : i32, i32, i32
  }
  func.func @transform_2(%arg0: i32, %arg1: i32, %arg2: i32, %arg3: i32) -> (i32, i32, i32) {
    %c0_i32 = arith.constant 0 : i32
    %c0_i32_0 = arith.constant 0 : i32
    return %arg0, %arg2, %c0_i32 : i32, i32, i32
  }
  func.func @transform_3(%arg0: i32, %arg1: i32, %arg2: i32, %arg3: i32) -> (i32, i32, i32) {
    %c0_i32 = arith.constant 0 : i32
    %c0_i32_0 = arith.constant 0 : i32
    return %arg0, %arg1, %c0_i32 : i32, i32, i32
  }
  func.func @transform_4(%arg0: i32, %arg1: i32, %arg2: i32, %arg3: i32) -> (i32, i32, i32) {
    %c0_i32 = arith.constant 0 : i32
    %c0_i32_0 = arith.constant 0 : i32
    %c0_i32_1 = arith.constant 0 : i32
    %c0_i32_2 = arith.constant 0 : i32
    return %c0_i32, %c0_i32_0, %c0_i32_1 : i32, i32, i32
  }
  func.func @transform_5(%arg0: i32, %arg1: i32, %arg2: i32, %arg3: i32) -> (i32, i32, i32) {
    %c0_i32 = arith.constant 0 : i32
    %c0_i32_0 = arith.constant 0 : i32
    %c0_i32_1 = arith.constant 0 : i32
    %c0_i32_2 = arith.constant 0 : i32
    return %c0_i32, %c0_i32_0, %c0_i32_1 : i32, i32, i32
  }
  func.func @transform_6(%arg0: i32, %arg1: i32, %arg2: i32, %arg3: i32) -> (i32, i32, i32) {
    %c0_i32 = arith.constant 0 : i32
    %c0_i32_0 = arith.constant 0 : i32
    %c0_i32_1 = arith.constant 0 : i32
    %c0_i32_2 = arith.constant 0 : i32
    return %c0_i32, %c0_i32_0, %c0_i32_1 : i32, i32, i32
  }
  func.func @transform_7(%arg0: i32, %arg1: i32, %arg2: i32, %arg3: i32) -> (i32, i32, i32) {
    %c0_i32 = arith.constant 0 : i32
    %c0_i32_0 = arith.constant 0 : i32
    %c0_i32_1 = arith.constant 0 : i32
    %c0_i32_2 = arith.constant 0 : i32
    return %c0_i32, %c0_i32_0, %c0_i32_1 : i32, i32, i32
  }
  func.func @transform_8(%arg0: i32, %arg1: i32, %arg2: i32, %arg3: i32) -> (i32, i32, i32) {
    %c0_i32 = arith.constant 0 : i32
    %c0_i32_0 = arith.constant 0 : i32
    %c0_i32_1 = arith.constant 0 : i32
    %c0_i32_2 = arith.constant 0 : i32
    return %c0_i32, %c0_i32_0, %c0_i32_1 : i32, i32, i32
  }
  func.func @transform_9(%arg0: i32, %arg1: i32, %arg2: i32, %arg3: i32) -> (i32, i32) {
    %c0_i32 = arith.constant 0 : i32
    %c0_i32_0 = arith.constant 0 : i32
    %c0_i32_1 = arith.constant 0 : i32
    return %c0_i32, %c0_i32_0 : i32, i32
  }
  func.func @transform_10(%arg0: i32, %arg1: i32, %arg2: i32, %arg3: i32) -> (i32, i32, i32) {
    %c0_i32 = arith.constant 0 : i32
    %c0_i32_0 = arith.constant 0 : i32
    return %arg0, %arg1, %c0_i32 : i32, i32, i32
  }
}

module attributes {stable_mosaic.version = 11 : i64} {
  func.func @_ffn_kernel(%arg0: i32, %arg1: i32, %arg2: memref<32x32xbf16, #tpu.memory_space<vmem>>, %arg3: memref<128x32xbf16, #tpu.memory_space<vmem>>, %arg4: memref<1x128xf32, #tpu.memory_space<vmem>>, %arg5: memref<32x128xbf16, #tpu.memory_space<vmem>>, %arg6: memref<1x32xf32, #tpu.memory_space<vmem>>, %arg7: memref<1x32xf32, #tpu.memory_space<vmem>>, %arg8: memref<1x32xf32, #tpu.memory_space<vmem>>, %arg9: memref<32x32xf32, #tpu.memory_space<vmem>>, %arg10: memref<32x32xf32, #tpu.memory_space<vmem>>) attributes {dimension_semantics = [#tpu.dimension_semantics<parallel>, #tpu.dimension_semantics<arbitrary>], iteration_bounds = array<i64: 2, 2>, scalar_prefetch = 0 : i64, scratch_operands = 1 : i64, tpu.core_type = #tpu.core_type<tc>, window_params = [{transform_indices = @transform_0, window_bounds = array<i64: 32, 32>}, {transform_indices = @transform_1, window_bounds = array<i64: 128, 32>}, {transform_indices = @transform_2, window_bounds = array<i64: 1, 128>}, {transform_indices = @transform_3, window_bounds = array<i64: 32, 128>}, {pipeline_mode = #tpu.pipeline_mode<synchronous>, transform_indices = @transform_4, window_bounds = array<i64: 1, 32>}, {pipeline_mode = #tpu.pipeline_mode<synchronous>, transform_indices = @transform_5, window_bounds = array<i64: 1, 32>}, {pipeline_mode = #tpu.pipeline_mode<synchronous>, transform_indices = @transform_6, window_bounds = array<i64: 1, 32>}, {transform_indices = @transform_7, window_bounds = array<i64: 32, 32>}]} {
    %c0_i32 = arith.constant 0 : i32
    %0 = arith.cmpi eq, %arg1, %c0_i32 : i32
    %1 = arith.extui %0 : i1 to i32
    %c0_i32_0 = arith.constant 0 : i32
    %2 = arith.cmpi ne, %1, %c0_i32_0 : i32
    scf.if %2 {
      %cst_15 = arith.constant 0.000000e+00 : f32
      %20 = vector.broadcast %cst_15 : f32 to vector<32x32xf32>
      %c0_16 = arith.constant 0 : index
      %c0_17 = arith.constant 0 : index
      %21 = vector.load %arg10[%c0_16, %c0_17] : memref<32x32xf32, #tpu.memory_space<vmem>>, vector<32x32xf32>
      tpu.vector_store %arg10[%c0_16, %c0_17], %20 {strides = array<i32>} : memref<32x32xf32, #tpu.memory_space<vmem>>, vector<32x32xf32>,
    } else {
    }
    %c0 = arith.constant 0 : index
    %c0_1 = arith.constant 0 : index
    %3 = vector.load %arg2[%c0, %c0_1] : memref<32x32xbf16, #tpu.memory_space<vmem>>, vector<32x32xbf16>
    %c0_2 = arith.constant 0 : index
    %c0_3 = arith.constant 0 : index
    %4 = vector.load %arg3[%c0_2, %c0_3] : memref<128x32xbf16, #tpu.memory_space<vmem>>, vector<128x32xbf16>
    %cst = arith.constant dense<0.000000e+00> : vector<32x128xf32>
    %5 = tpu.matmul %3, %4, %cst {dimension_numbers = #tpu.dot_dimension_numbers<[1], [1], [0], [0], [0, 0, 1, 0], [], []>} : vector<32x32xbf16>, vector<128x32xbf16>, vector<32x128xf32> -> vector<32x128xf32>
    %c0_4 = arith.constant 0 : index
    %c0_5 = arith.constant 0 : index
    %6 = vector.load %arg4[%c0_4, %c0_5] : memref<1x128xf32, #tpu.memory_space<vmem>>, vector<1x128xf32>
    %7 = vector.broadcast %6 : vector<1x128xf32> to vector<32x128xf32>
    %8 = arith.addf %5, %7 : vector<32x128xf32>
    %cst_6 = arith.constant 0.000000e+00 : f32
    %9 = vector.broadcast %cst_6 : f32 to vector<32x128xf32>
    %10 = arith.maximumf %8, %9 : vector<32x128xf32>
    %c0_7 = arith.constant 0 : index
    %c0_8 = arith.constant 0 : index
    %11 = vector.load %arg10[%c0_7, %c0_8] : memref<32x32xf32, #tpu.memory_space<vmem>>, vector<32x32xf32>
    %12 = arith.truncf %10 : vector<32x128xf32> to vector<32x128xbf16>
    %c0_9 = arith.constant 0 : index
    %c0_10 = arith.constant 0 : index
    %13 = vector.load %arg5[%c0_9, %c0_10] : memref<32x128xbf16, #tpu.memory_space<vmem>>, vector<32x128xbf16>
    %cst_11 = arith.constant dense<0.000000e+00> : vector<32x32xf32>
    %14 = tpu.matmul %12, %13, %cst_11 {dimension_numbers = #tpu.dot_dimension_numbers<[1], [1], [0], [0], [0, 0, 1, 0], [], []>} : vector<32x128xbf16>, vector<32x128xbf16>, vector<32x32xf32> -> vector<32x32xf32>
    %15 = arith.addf %11, %14 : vector<32x32xf32>
    %c0_12 = arith.constant 0 : index
    %c0_13 = arith.constant 0 : index
    %16 = vector.load %arg10[%c0_12, %c0_13] : memref<32x32xf32, #tpu.memory_space<vmem>>, vector<32x32xf32>
    tpu.vector_store %arg10[%c0_12, %c0_13], %15 {strides = array<i32>} : memref<32x32xf32, #tpu.memory_space<vmem>>, vector<32x32xf32>,
    %c1_i32 = arith.constant 1 : i32
    %17 = arith.cmpi eq, %arg1, %c1_i32 : i32
    %18 = arith.extui %17 : i1 to i32
    %c0_i32_14 = arith.constant 0 : i32
    %19 = arith.cmpi ne, %18, %c0_i32_14 : i32
    scf.if %19 {
      %c0_15 = arith.constant 0 : index
      %c0_16 = arith.constant 0 : index
      %20 = vector.load %arg10[%c0_15, %c0_16] : memref<32x32xf32, #tpu.memory_space<vmem>>, vector<32x32xf32>
      %c0_17 = arith.constant 0 : index
      %c0_18 = arith.constant 0 : index
      %21 = vector.load %arg6[%c0_17, %c0_18] : memref<1x32xf32, #tpu.memory_space<vmem>>, vector<1x32xf32>
      %22 = vector.broadcast %21 : vector<1x32xf32> to vector<32x32xf32>
      %23 = arith.addf %20, %22 : vector<32x32xf32>
      %c0_19 = arith.constant 0 : index
      %c0_20 = arith.constant 0 : index
      %24 = vector.load %arg2[%c0_19, %c0_20] : memref<32x32xbf16, #tpu.memory_space<vmem>>, vector<32x32xbf16>
      %25 = arith.extf %24 : vector<32x32xbf16> to vector<32x32xf32>
      %26 = arith.addf %23, %25 : vector<32x32xf32>
      %cst_21 = arith.constant dense<0.000000e+00> : vector<32xf32>
      %27 = vector.multi_reduction <add>, %26, %cst_21 [1] : vector<32x32xf32> to vector<32xf32>
      %28 = vector.shape_cast %27 : vector<32xf32> to vector<32x1xf32>
      %cst_22 = arith.constant 3.200000e+01 : f32
      %29 = vector.broadcast %cst_22 : f32 to vector<32x1xf32>
      %30 = arith.divf %28, %29 : vector<32x1xf32>
      %31 = vector.broadcast %30 : vector<32x1xf32> to vector<32x32xf32>
      %32 = arith.subf %26, %31 : vector<32x32xf32>
      %33 = arith.mulf %32, %32 : vector<32x32xf32>
      %cst_23 = arith.constant dense<0.000000e+00> : vector<32xf32>
      %34 = vector.multi_reduction <add>, %33, %cst_23 [1] : vector<32x32xf32> to vector<32xf32>
      %35 = vector.shape_cast %34 : vector<32xf32> to vector<32x1xf32>
      %cst_24 = arith.constant 3.200000e+01 : f32
      %36 = vector.broadcast %cst_24 : f32 to vector<32x1xf32>
      %37 = arith.divf %35, %36 : vector<32x1xf32>
      %38 = vector.broadcast %30 : vector<32x1xf32> to vector<32x32xf32>
      %39 = arith.subf %26, %38 : vector<32x32xf32>
      %cst_25 = arith.constant 9.99999974E-6 : f32
      %40 = vector.broadcast %cst_25 : f32 to vector<32x1xf32>
      %41 = arith.addf %37, %40 : vector<32x1xf32>
      %42 = math.rsqrt %41 : vector<32x1xf32>
      %43 = vector.broadcast %42 : vector<32x1xf32> to vector<32x32xf32>
      %44 = arith.mulf %39, %43 : vector<32x32xf32>
      %c0_26 = arith.constant 0 : index
      %c0_27 = arith.constant 0 : index
      %45 = vector.load %arg7[%c0_26, %c0_27] : memref<1x32xf32, #tpu.memory_space<vmem>>, vector<1x32xf32>
      %46 = vector.broadcast %45 : vector<1x32xf32> to vector<32x32xf32>
      %47 = arith.mulf %44, %46 : vector<32x32xf32>
      %c0_28 = arith.constant 0 : index
      %c0_29 = arith.constant 0 : index
      %48 = vector.load %arg8[%c0_28, %c0_29] : memref<1x32xf32, #tpu.memory_space<vmem>>, vector<1x32xf32>
      %49 = vector.broadcast %48 : vector<1x32xf32> to vector<32x32xf32>
      %50 = arith.addf %47, %49 : vector<32x32xf32>
      %c0_30 = arith.constant 0 : index
      %c0_31 = arith.constant 0 : index
      %51 = vector.load %arg9[%c0_30, %c0_31] : memref<32x32xf32, #tpu.memory_space<vmem>>, vector<32x32xf32>
      tpu.vector_store %arg9[%c0_30, %c0_31], %50 {strides = array<i32>} : memref<32x32xf32, #tpu.memory_space<vmem>>, vector<32x32xf32>,
    } else {
    }
    return
  }
  func.func @transform_0(%arg0: i32, %arg1: i32) -> (i32, i32) {
    %c0_i32 = arith.constant 0 : i32
    %c0_i32_0 = arith.constant 0 : i32
    return %arg0, %c0_i32 : i32, i32
  }
  func.func @transform_1(%arg0: i32, %arg1: i32) -> (i32, i32) {
    %c0_i32 = arith.constant 0 : i32
    %c0_i32_0 = arith.constant 0 : i32
    return %arg1, %c0_i32 : i32, i32
  }
  func.func @transform_2(%arg0: i32, %arg1: i32) -> (i32, i32) {
    %c0_i32 = arith.constant 0 : i32
    %c0_i32_0 = arith.constant 0 : i32
    return %c0_i32, %arg1 : i32, i32
  }
  func.func @transform_3(%arg0: i32, %arg1: i32) -> (i32, i32) {
    %c0_i32 = arith.constant 0 : i32
    %c0_i32_0 = arith.constant 0 : i32
    return %c0_i32, %arg1 : i32, i32
  }
  func.func @transform_4(%arg0: i32, %arg1: i32) -> (i32, i32) {
    %c0_i32 = arith.constant 0 : i32
    %c0_i32_0 = arith.constant 0 : i32
    %c0_i32_1 = arith.constant 0 : i32
    return %c0_i32, %c0_i32_0 : i32, i32
  }
  func.func @transform_5(%arg0: i32, %arg1: i32) -> (i32, i32) {
    %c0_i32 = arith.constant 0 : i32
    %c0_i32_0 = arith.constant 0 : i32
    %c0_i32_1 = arith.constant 0 : i32
    return %c0_i32, %c0_i32_0 : i32, i32
  }
  func.func @transform_6(%arg0: i32, %arg1: i32) -> (i32, i32) {
    %c0_i32 = arith.constant 0 : i32
    %c0_i32_0 = arith.constant 0 : i32
    %c0_i32_1 = arith.constant 0 : i32
    return %c0_i32, %c0_i32_0 : i32, i32
  }
  func.func @transform_7(%arg0: i32, %arg1: i32) -> (i32, i32) {
    %c0_i32 = arith.constant 0 : i32
    %c0_i32_0 = arith.constant 0 : i32
    return %arg0, %c0_i32 : i32, i32
  }
}

</mosaic_0001>

<llo_original>
// kernel: t_d_layer_forward.2
$region0: #{t_d_layer_forward.2}
  #allocation0 [shape = 'u32[]', space=smem, size = 0x4, offset = 0x4, fixed_abs, tag = 'smem constant byte address 0x4 - core index']
  #allocation1 [shape = 'u32[144,128]{1,0:T(1,128)}', space=vmem, size = 0x12000, scoped, tag = 'internal scratch']
  #allocation2 [shape = 'bf16[4,16,8]{2,1,0:T(8,128)(2,1)}', space=vmem, size = 0x4000, scoped, tag = 'scratch operand']
  #allocation3 [shape = 'f32[4,16,8]{2,1,0:T(8,128)}', space=vmem, size = 0x8000, scoped, tag = 'scratch operand']
  #allocation4 [shape = 'f32[4,16,1]{2,1,0:T(8,128)}', space=vmem, size = 0x8000, scoped, tag = 'scratch operand']
  #allocation5 [shape = 'f32[4,16,1]{2,1,0:T(8,128)}', space=vmem, size = 0x8000, scoped, tag = 'scratch operand']
  #allocation6 [shape = 'f32[16,32]{1,0:T(8,128)}', space=vmem, size = 0x2000, scoped, tag = 'scratch operand']
  %s0 = inlined_call_operand.vmem [shape: bf16[2,32,32], index: 0, kind: input, shape index: {}]
  %s1 = inlined_call_operand.vmem [shape: bf16[2,32,32], index: 1, kind: input, shape index: {}]
  %s2 = inlined_call_operand.vmem [shape: bf16[2,32,32], index: 2, kind: input, shape index: {}]
  %s3 = inlined_call_operand.vmem [shape: f32[2,32,32], index: 3, kind: input, shape index: {}]
  %s4 = inlined_call_operand.vmem [shape: bf16[4,8,32], index: 4, kind: input, shape index: {}]
  %s5 = inlined_call_operand.vmem [shape: bf16[4,8,32], index: 5, kind: input, shape index: {}]
  %s6 = inlined_call_operand.vmem [shape: bf16[4,8,32], index: 6, kind: input, shape index: {}]
  %s7 = inlined_call_operand.vmem [shape: bf16[4,8,32], index: 7, kind: input, shape index: {}]
  %s8 = inlined_call_operand.vmem [shape: f32[4,3,8], index: 8, kind: input, shape index: {}]
  %s9 = inlined_call_operand.vmem [shape: f32[3,32], index: 9, kind: input, shape index: {}]
  %s10 = inlined_call_operand.vmem [shape: bf16[2,32,32], index: 10, kind: output, shape index: {}]
  %s11 = sld [smem:[#allocation0]]
  $region89: #{t_d_layer_forward.2} parent=0
    _
  %s13 = ssub.s32 1, %s11
  %s14 = scalar_select 0, %s13, %s11
  loop: start=0, step=1, limit=34
  $region2: #{t_d_layer_forward.2} parent=0 // loop_pre_header
    _
  $region3: #{t_d_layer_forward.2} parent=0 // loop_header
    %s16 = sphi 0, %s20
    %p17 = scmp.ge.s32.totalorder %s16, 34
    %s23 = sphi 0, %s49
    %s24 = sphi 0, %s45
    %s25 = sphi 0, %s41
    %s26 = sphi 0, %s37
    %s27 = sphi 0, %s23
    %s28 = sphi 0, %s24
    %s29 = sphi 0, %s25
    %s30 = sphi 0, %s26
    %s31 = sphi 0, %s27
    %s32 = sphi 0, %s28
    %s33 = sphi 0, %s29
    %s34 = sphi 0, %s30
    %s54 = sphi 0, %s56
    %s57 = sphi 0, %s54
    %s58 = sphi 0, %s57
    %s74 = sphi 0, %s58
    %s82 = sphi 0, %s84
    %s85 = sphi 0, %s82
    %s86 = sphi 0, %s85
    %s102 = sphi 0, %s86
    %s110 = sphi 0, %s112
    %s113 = sphi 0, %s110
    %s114 = sphi 0, %s113
    %s130 = sphi 0, %s114
    %s138 = sphi 0, %s140
    %s141 = sphi 0, %s138
    %s142 = sphi 0, %s141
    %s158 = sphi 0, %s142
    %s162 = sphi 0, %s162
    %s164 = sphi 0, %s162
    %s165 = sphi 0, %s164
    %s179 = sphi 0, %s165
    %s183 = sphi 0, %s183
    %s185 = sphi 0, %s183
    %s186 = sphi 0, %s185
    %s200 = sphi 0, %s186
    %s204 = sphi 0, %s204
    %s206 = sphi 0, %s204
    %s207 = sphi 0, %s206
    %s221 = sphi 0, %s207
    %s225 = sphi 0, %s225
    %s227 = sphi 0, %s225
    %s228 = sphi 0, %s227
    %s242 = sphi 0, %s228
    %s246 = sphi 0, %s246
    %s248 = sphi 0, %s246
    %s249 = sphi 0, %s248
    %s263 = sphi 0, %s249
    %s267 = sphi 0, %s267
    %s269 = sphi 0, %s267
    %s270 = sphi 0, %s269
    %s284 = sphi 0, %s270
    %s292 = sphi 0, %s294
    %s295 = sphi 0, %s292
    %s296 = sphi 0, %s295
    %s312 = sphi 0, %s296
  $region4: #{t_d_layer_forward.2} parent=0 // loop_header_branch
    %19 = sbr.rel (%p17) target = $region8
  $region5: #{t_d_layer_forward.2} parent=0 // loop_body
    %s21 = ssub.s32 %s16, 1
    %s22 = ssub.s32 %s16, 2
    %s35 = sadd.s32 1, %s26
    %p36 = scmp.ge.s32.totalorder %s35, 4
    %s37 = scalar_select %p36, 0, %s35
    %s38 = sadd.s32 1, %s25
    %s39 = scalar_select %p36, %s38, %s25
    %p40 = scmp.ge.s32.totalorder %s39, 2
    %s41 = scalar_select %p40, 0, %s39
    %s42 = sadd.s32 1, %s24
    %s43 = scalar_select %p40, %s42, %s24
    %p44 = scmp.ge.s32.totalorder %s43, 2
    %s45 = scalar_select %p44, 0, %s43
    %s46 = sadd.s32 1, %s23
    %s47 = scalar_select %p44, %s46, %s23
    %p48 = scmp.ge.s32.totalorder %s47, 2
    %s49 = scalar_select %p48, 0, %s47
    %s50 = ssub.s32 %s23, %s49
    %s51 = ssub.s32 %s24, %s45
    %s52 = sor.u32 %s50, %s51
    %p53 = scmp.eq.s32.totalorder %s52, 0
    %s55 = sadd.s32 %s54, 1
    %s56 = scalar_select %p53, %s54, %s55
    %p59 = pneg %p53
    %p60 = scmp.eq.s32.totalorder %s16, 31
    %p61 = por %p59, %p60
    %p62 = scmp.ne.s32.totalorder %s54, %s57
    %p63 = scmp.eq.s32.totalorder %s16, 0
    %p64 = por %p62, %p63
    %p65 = scmp.ne.s32.totalorder %s54, %s57
    %p66 = scmp.eq.s32.totalorder %s21, 31
    %p67 = por %p65, %p66
    %p68 = scmp.ne.s32.totalorder %s57, %s58
    %p69 = scmp.eq.s32.totalorder %s21, 0
    %p70 = por %p68, %p69
    %p71 = scmp.ne.s32.totalorder %s57, %s58
    %p72 = scmp.eq.s32.totalorder %s22, 31
    %p73 = por %p71, %p72
    %p75 = scmp.ne.s32.totalorder %s58, %s74
    %p76 = scmp.eq.s32.totalorder %s22, 0
    %p77 = por %p75, %p76
    %s78 = ssub.s32 %s23, %s49
    %s79 = ssub.s32 %s25, %s41
    %s80 = sor.u32 %s78, %s79
    %p81 = scmp.eq.s32.totalorder %s80, 0
    %s83 = sadd.s32 %s82, 1
    %s84 = scalar_select %p81, %s82, %s83
    %p87 = pneg %p81
    %p88 = scmp.eq.s32.totalorder %s16, 31
    %p89 = por %p87, %p88
    %p90 = scmp.ne.s32.totalorder %s82, %s85
    %p91 = scmp.eq.s32.totalorder %s16, 0
    %p92 = por %p90, %p91
    %p93 = scmp.ne.s32.totalorder %s82, %s85
    %p94 = scmp.eq.s32.totalorder %s21, 31
    %p95 = por %p93, %p94
    %p96 = scmp.ne.s32.totalorder %s85, %s86
    %p97 = scmp.eq.s32.totalorder %s21, 0
    %p98 = por %p96, %p97
    %p99 = scmp.ne.s32.totalorder %s85, %s86
    %p100 = scmp.eq.s32.totalorder %s22, 31
    %p101 = por %p99, %p100
    %p103 = scmp.ne.s32.totalorder %s86, %s102
    %p104 = scmp.eq.s32.totalorder %s22, 0
    %p105 = por %p103, %p104
    %s106 = ssub.s32 %s23, %s49
    %s107 = ssub.s32 %s25, %s41
    %s108 = sor.u32 %s106, %s107
    %p109 = scmp.eq.s32.totalorder %s108, 0
    %s111 = sadd.s32 %s110, 1
    %s112 = scalar_select %p109, %s110, %s111
    %p115 = pneg %p109
    %p116 = scmp.eq.s32.totalorder %s16, 31
    %p117 = por %p115, %p116
    %p118 = scmp.ne.s32.totalorder %s110, %s113
    %p119 = scmp.eq.s32.totalorder %s16, 0
    %p120 = por %p118, %p119
    %p121 = scmp.ne.s32.totalorder %s110, %s113
    %p122 = scmp.eq.s32.totalorder %s21, 31
    %p123 = por %p121, %p122
    %p124 = scmp.ne.s32.totalorder %s113, %s114
    %p125 = scmp.eq.s32.totalorder %s21, 0
    %p126 = por %p124, %p125
    %p127 = scmp.ne.s32.totalorder %s113, %s114
    %p128 = scmp.eq.s32.totalorder %s22, 31
    %p129 = por %p127, %p128
    %p131 = scmp.ne.s32.totalorder %s114, %s130
    %p132 = scmp.eq.s32.totalorder %s22, 0
    %p133 = por %p131, %p132
    %s134 = ssub.s32 %s23, %s49
    %s135 = ssub.s32 %s24, %s45
    %s136 = sor.u32 %s134, %s135
    %p137 = scmp.eq.s32.totalorder %s136, 0
    %s139 = sadd.s32 %s138, 1
    %s140 = scalar_select %p137, %s138, %s139
    %p143 = pneg %p137
    %p144 = scmp.eq.s32.totalorder %s16, 31
    %p145 = por %p143, %p144
    %p146 = scmp.ne.s32.totalorder %s138, %s141
    %p147 = scmp.eq.s32.totalorder %s16, 0
    %p148 = por %p146, %p147
    %p149 = scmp.ne.s32.totalorder %s138, %s141
    %p150 = scmp.eq.s32.totalorder %s21, 31
    %p151 = por %p149, %p150
    %p152 = scmp.ne.s32.totalorder %s141, %s142
    %p153 = scmp.eq.s32.totalorder %s21, 0
    %p154 = por %p152, %p153
    %p155 = scmp.ne.s32.totalorder %s141, %s142
    %p156 = scmp.eq.s32.totalorder %s22, 31
    %p157 = por %p155, %p156
    %p159 = scmp.ne.s32.totalorder %s142, %s158
    %p160 = scmp.eq.s32.totalorder %s22, 0
    %p161 = por %p159, %p160
    %s163 = sadd.s32 %s162, 1
    %p166 = scmp.eq.s32.totalorder %s16, 31
    %p167 = scmp.ne.s32.totalorder %s162, %s164
    %p168 = scmp.eq.s32.totalorder %s16, 0
    %p169 = por %p167, %p168
    %p170 = scmp.ne.s32.totalorder %s162, %s164
    %p171 = scmp.eq.s32.totalorder %s21, 31
    %p172 = por %p170, %p171
    %p173 = scmp.ne.s32.totalorder %s164, %s165
    %p174 = scmp.eq.s32.totalorder %s21, 0
    %p175 = por %p173, %p174
    %p176 = scmp.ne.s32.totalorder %s164, %s165
    %p177 = scmp.eq.s32.totalorder %s22, 31
    %p178 = por %p176, %p177
    %p180 = scmp.ne.s32.totalorder %s165, %s179
    %p181 = scmp.eq.s32.totalorder %s22, 0
    %p182 = por %p180, %p181
    %s184 = sadd.s32 %s183, 1
    %p187 = scmp.eq.s32.totalorder %s16, 31
    %p188 = scmp.ne.s32.totalorder %s183, %s185
    %p189 = scmp.eq.s32.totalorder %s16, 0
    %p190 = por %p188, %p189
    %p191 = scmp.ne.s32.totalorder %s183, %s185
    %p192 = scmp.eq.s32.totalorder %s21, 31
    %p193 = por %p191, %p192
    %p194 = scmp.ne.s32.totalorder %s185, %s186
    %p195 = scmp.eq.s32.totalorder %s21, 0
    %p196 = por %p194, %p195
    %p197 = scmp.ne.s32.totalorder %s185, %s186
    %p198 = scmp.eq.s32.totalorder %s22, 31
    %p199 = por %p197, %p198
    %p201 = scmp.ne.s32.totalorder %s186, %s200
    %p202 = scmp.eq.s32.totalorder %s22, 0
    %p203 = por %p201, %p202
    %s205 = sadd.s32 %s204, 1
    %p208 = scmp.eq.s32.totalorder %s16, 31
    %p209 = scmp.ne.s32.totalorder %s204, %s206
    %p210 = scmp.eq.s32.totalorder %s16, 0
    %p211 = por %p209, %p210
    %p212 = scmp.ne.s32.totalorder %s204, %s206
    %p213 = scmp.eq.s32.totalorder %s21, 31
    %p214 = por %p212, %p213
    %p215 = scmp.ne.s32.totalorder %s206, %s207
    %p216 = scmp.eq.s32.totalorder %s21, 0
    %p217 = por %p215, %p216
    %p218 = scmp.ne.s32.totalorder %s206, %s207
    %p219 = scmp.eq.s32.totalorder %s22, 31
    %p220 = por %p218, %p219
    %p222 = scmp.ne.s32.totalorder %s207, %s221
    %p223 = scmp.eq.s32.totalorder %s22, 0
    %p224 = por %p222, %p223
    %s226 = sadd.s32 %s225, 1
    %p229 = scmp.eq.s32.totalorder %s16, 31
    %p230 = scmp.ne.s32.totalorder %s225, %s227
    %p231 = scmp.eq.s32.totalorder %s16, 0
    %p232 = por %p230, %p231
    %p233 = scmp.ne.s32.totalorder %s225, %s227
    %p234 = scmp.eq.s32.totalorder %s21, 31
    %p235 = por %p233, %p234
    %p236 = scmp.ne.s32.totalorder %s227, %s228
    %p237 = scmp.eq.s32.totalorder %s21, 0
    %p238 = por %p236, %p237
    %p239 = scmp.ne.s32.totalorder %s227, %s228
    %p240 = scmp.eq.s32.totalorder %s22, 31
    %p241 = por %p239, %p240
    %p243 = scmp.ne.s32.totalorder %s228, %s242
    %p244 = scmp.eq.s32.totalorder %s22, 0
    %p245 = por %p243, %p244
    %s247 = sadd.s32 %s246, 1
    %p250 = scmp.eq.s32.totalorder %s16, 31
    %p251 = scmp.ne.s32.totalorder %s246, %s248
    %p252 = scmp.eq.s32.totalorder %s16, 0
    %p253 = por %p251, %p252
    %p254 = scmp.ne.s32.totalorder %s246, %s248
    %p255 = scmp.eq.s32.totalorder %s21, 31
    %p256 = por %p254, %p255
    %p257 = scmp.ne.s32.totalorder %s248, %s249
    %p258 = scmp.eq.s32.totalorder %s21, 0
    %p259 = por %p257, %p258
    %p260 = scmp.ne.s32.totalorder %s248, %s249
    %p261 = scmp.eq.s32.totalorder %s22, 31
    %p262 = por %p260, %p261
    %p264 = scmp.ne.s32.totalorder %s249, %s263
    %p265 = scmp.eq.s32.totalorder %s22, 0
    %p266 = por %p264, %p265
    %s268 = sadd.s32 %s267, 1
    %p271 = scmp.eq.s32.totalorder %s16, 31
    %p272 = scmp.ne.s32.totalorder %s267, %s269
    %p273 = scmp.eq.s32.totalorder %s16, 0
    %p274 = por %p272, %p273
    %p275 = scmp.ne.s32.totalorder %s267, %s269
    %p276 = scmp.eq.s32.totalorder %s21, 31
    %p277 = por %p275, %p276
    %p278 = scmp.ne.s32.totalorder %s269, %s270
    %p279 = scmp.eq.s32.totalorder %s21, 0
    %p280 = por %p278, %p279
    %p281 = scmp.ne.s32.totalorder %s269, %s270
    %p282 = scmp.eq.s32.totalorder %s22, 31
    %p283 = por %p281, %p282
    %p285 = scmp.ne.s32.totalorder %s270, %s284
    %p286 = scmp.eq.s32.totalorder %s22, 0
    %p287 = por %p285, %p286
    %s288 = ssub.s32 %s23, %s49
    %s289 = ssub.s32 %s24, %s45
    %s290 = sor.u32 %s288, %s289
    %p291 = scmp.eq.s32.totalorder %s290, 0
    %s293 = sadd.s32 %s292, 1
    %s294 = scalar_select %p291, %s292, %s293
    %p297 = pneg %p291
    %p298 = scmp.eq.s32.totalorder %s16, 31
    %p299 = por %p297, %p298
    %p300 = scmp.ne.s32.totalorder %s292, %s295
    %p301 = scmp.eq.s32.totalorder %s16, 0
    %p302 = por %p300, %p301
    %p303 = scmp.ne.s32.totalorder %s292, %s295
    %p304 = scmp.eq.s32.totalorder %s21, 31
    %p305 = por %p303, %p304
    %p306 = scmp.ne.s32.totalorder %s295, %s296
    %p307 = scmp.eq.s32.totalorder %s21, 0
    %p308 = por %p306, %p307
    %p309 = scmp.ne.s32.totalorder %s295, %s296
    %p310 = scmp.eq.s32.totalorder %s22, 31
    %p311 = por %p309, %p310
    %p313 = scmp.ne.s32.totalorder %s296, %s312
    %p314 = scmp.eq.s32.totalorder %s22, 0
    %p315 = por %p313, %p314
    %p316 = scmp.le.s32.totalorder 1, %s16
    %p317 = scmp.lt.s32.totalorder %s16, 33
    %p318 = pnand %p316, %p317
    %p319 = pneg %p318
    // Predicated region
    $region9: #{t_d_layer_forward.2} parent=5 // pred_check
      _
    $region10: #{t_d_layer_forward.2} parent=5 // pred_check_branch
      %321 = sbr.rel (%p318) target = $region12
    $region11: #{t_d_layer_forward.2} parent=5 // pred_region
      %s322 = ssub.s32 %s16, 1
      // Predicated region
      $region13: #{t_d_layer_forward.2} parent=11 // pred_check
        %p323 = pneg %p175
      $region14: #{t_d_layer_forward.2} parent=11 // pred_check_branch
        %325 = sbr.rel (%p323) target = $region16
      $region15: #{t_d_layer_forward.2} parent=11 // pred_region
        _
      $region16: #{t_d_layer_forward.2} parent=11 // pred_fallthru
        _
      // Predicated region
      $region17: #{t_d_layer_forward.2} parent=11 // pred_check
        %p326 = pneg %p196
      $region18: #{t_d_layer_forward.2} parent=11 // pred_check_branch
        %328 = sbr.rel (%p326) target = $region20
      $region19: #{t_d_layer_forward.2} parent=11 // pred_region
        _
      $region20: #{t_d_layer_forward.2} parent=11 // pred_fallthru
        _
      // Predicated region
      $region21: #{t_d_layer_forward.2} parent=11 // pred_check
        %p329 = pneg %p217
      $region22: #{t_d_layer_forward.2} parent=11 // pred_check_branch
        %331 = sbr.rel (%p329) target = $region24
      $region23: #{t_d_layer_forward.2} parent=11 // pred_region
        _
      $region24: #{t_d_layer_forward.2} parent=11 // pred_fallthru
        _
      // Predicated region
      $region25: #{t_d_layer_forward.2} parent=11 // pred_check
        %p332 = pneg %p238
      $region26: #{t_d_layer_forward.2} parent=11 // pred_check_branch
        %334 = sbr.rel (%p332) target = $region28
      $region27: #{t_d_layer_forward.2} parent=11 // pred_region
        _
      $region28: #{t_d_layer_forward.2} parent=11 // pred_fallthru
        _
      // Predicated region
      $region29: #{t_d_layer_forward.2} parent=11 // pred_check
        %p335 = pneg %p259
      $region30: #{t_d_layer_forward.2} parent=11 // pred_check_branch
        %337 = sbr.rel (%p335) target = $region32
      $region31: #{t_d_layer_forward.2} parent=11 // pred_region
        _
      $region32: #{t_d_layer_forward.2} parent=11 // pred_fallthru
        _
      // Predicated region
      $region33: #{t_d_layer_forward.2} parent=11 // pred_check
        %p338 = pneg %p280
      $region34: #{t_d_layer_forward.2} parent=11 // pred_check_branch
        %340 = sbr.rel (%p338) target = $region36
      $region35: #{t_d_layer_forward.2} parent=11 // pred_region
        _
      $region36: #{t_d_layer_forward.2} parent=11 // pred_fallthru
        _
    $region12: #{t_d_layer_forward.2} parent=5 // pred_fallthru
      _
    %p341 = scmp.lt.s32.totalorder %s16, 32
    // Predicated region
    $region37: #{t_d_layer_forward.2} parent=5 // pred_check
      %p342 = pneg %p341
    $region38: #{t_d_layer_forward.2} parent=5 // pred_check_branch
      %344 = sbr.rel (%p342) target = $region40
    $region39: #{t_d_layer_forward.2} parent=5 // pred_region
      // Predicated region
      $region41: #{t_d_layer_forward.2} parent=39 // pred_check
        %p345 = pneg %p64
      $region42: #{t_d_layer_forward.2} parent=39 // pred_check_branch
        %347 = sbr.rel (%p345) target = $region44
      $region43: #{t_d_layer_forward.2} parent=39 // pred_region
        %s348 = smul.u32 2, %s24
        %p349 = scmp.lt.s32.totalorder %s23, 1
        %s350 = scalar_select %p349, %s23, 1
        %p351 = scmp.lt.s32.totalorder %s348, 3
        %s352 = scalar_select %p351, %s348, 3
        %s353 = smul.addr %s350, 4
        %s354 = sadd.s32 %s352, %s353
        %s355 = smul.addr %s354, 4
        %s356 = scalar_lea.vmem %s0, %s355
        %s357 = smul.u32 2, %s24
      $region44: #{t_d_layer_forward.2} parent=39 // pred_fallthru
        _
      // Predicated region
      $region45: #{t_d_layer_forward.2} parent=39 // pred_check
        %p358 = pneg %p92
      $region46: #{t_d_layer_forward.2} parent=39 // pred_check_branch
        %360 = sbr.rel (%p358) target = $region48
      $region47: #{t_d_layer_forward.2} parent=39 // pred_region
        %s361 = smul.u32 2, %s25
        %p362 = scmp.lt.s32.totalorder %s23, 1
        %s363 = scalar_select %p362, %s23, 1
        %p364 = scmp.lt.s32.totalorder %s361, 3
        %s365 = scalar_select %p364, %s361, 3
        %s366 = smul.addr %s363, 4
        %s367 = sadd.s32 %s365, %s366
        %s368 = smul.addr %s367, 4
        %s369 = scalar_lea.vmem %s1, %s368
        %s370 = smul.u32 2, %s25
      $region48: #{t_d_layer_forward.2} parent=39 // pred_fallthru
        _
      // Predicated region
      $region49: #{t_d_layer_forward.2} parent=39 // pred_check
        %p371 = pneg %p120
      $region50: #{t_d_layer_forward.2} parent=39 // pred_check_branch
        %373 = sbr.rel (%p371) target = $region52
      $region51: #{t_d_layer_forward.2} parent=39 // pred_region
        %s374 = smul.u32 2, %s25
        %p375 = scmp.lt.s32.totalorder %s23, 1
        %s376 = scalar_select %p375, %s23, 1
        %p377 = scmp.lt.s32.totalorder %s374, 3
        %s378 = scalar_select %p377, %s374, 3
        %s379 = smul.addr %s376, 4
        %s380 = sadd.s32 %s378, %s379
        %s381 = smul.addr %s380, 4
        %s382 = scalar_lea.vmem %s2, %s381
        %s383 = smul.u32 2, %s25
      $region52: #{t_d_layer_forward.2} parent=39 // pred_fallthru
        _
      // Predicated region
      $region53: #{t_d_layer_forward.2} parent=39 // pred_check
        %p384 = pneg %p148
      $region54: #{t_d_layer_forward.2} parent=39 // pred_check_branch
        %386 = sbr.rel (%p384) target = $region56
      $region55: #{t_d_layer_forward.2} parent=39 // pred_region
        %s387 = smul.u32 2, %s24
        %p388 = scmp.lt.s32.totalorder %s23, 1
        %s389 = scalar_select %p388, %s23, 1
        %p390 = scmp.lt.s32.totalorder %s387, 3
        %s391 = scalar_select %p390, %s387, 3
        %s392 = smul.addr %s389, 4
        %s393 = sadd.s32 %s391, %s392
        %s394 = smul.addr %s393, 8
        %s395 = scalar_lea.vmem %s3, %s394
        %s396 = smul.u32 2, %s24
      $region56: #{t_d_layer_forward.2} parent=39 // pred_fallthru
        _
    $region40: #{t_d_layer_forward.2} parent=5 // pred_fallthru
      _
    %p397 = scmp.le.s32.totalorder 1, %s16
    %p398 = scmp.lt.s32.totalorder %s16, 33
    %p399 = pnand %p397, %p398
    %p400 = pneg %p399
    // Predicated region
    $region57: #{t_d_layer_forward.2} parent=5 // pred_check
      _
    $region58: #{t_d_layer_forward.2} parent=5 // pred_check_branch
      %402 = sbr.rel (%p399) target = $region60
    $region59: #{t_d_layer_forward.2} parent=5 // pred_region
      %s403 = ssub.s32 %s16, 1
      %s404 = smul.u32 2, %s28
      %p405 = scmp.lt.s32.totalorder %s27, 1
      %s406 = scalar_select %p405, %s27, 1
      %p407 = scmp.lt.s32.totalorder %s404, 3
      %s408 = scalar_select %p407, %s404, 3
      %s409 = smul.addr %s406, 4
      %s410 = sadd.s32 %s408, %s409
      %s411 = smul.addr %s410, 4
      %s412 = scalar_lea.vmem %s0, %s411
      %p413 = pneg %p70
      %p414 = pneg %p67
      %s415 = smul.u32 2, %s29
      %p416 = scmp.lt.s32.totalorder %s27, 1
      %s417 = scalar_select %p416, %s27, 1
      %p418 = scmp.lt.s32.totalorder %s415, 3
      %s419 = scalar_select %p418, %s415, 3
      %s420 = smul.addr %s417, 4
      %s421 = sadd.s32 %s419, %s420
      %s422 = smul.addr %s421, 4
      %s423 = scalar_lea.vmem %s1, %s422
      %p424 = pneg %p98
      %p425 = pneg %p95
      %s426 = smul.u32 2, %s29
      %p427 = scmp.lt.s32.totalorder %s27, 1
      %s428 = scalar_select %p427, %s27, 1
      %p429 = scmp.lt.s32.totalorder %s426, 3
      %s430 = scalar_select %p429, %s426, 3
      %s431 = smul.addr %s428, 4
      %s432 = sadd.s32 %s430, %s431
      %s433 = smul.addr %s432, 4
      %s434 = scalar_lea.vmem %s2, %s433
      %p435 = pneg %p126
      %p436 = pneg %p123
      %s437 = smul.u32 2, %s28
      %p438 = scmp.lt.s32.totalorder %s27, 1
      %s439 = scalar_select %p438, %s27, 1
      %p440 = scmp.lt.s32.totalorder %s437, 3
      %s441 = scalar_select %p440, %s437, 3
      %s442 = smul.addr %s439, 4
      %s443 = sadd.s32 %s441, %s442
      %s444 = smul.addr %s443, 8
      %s445 = scalar_lea.vmem %s3, %s444
      %p446 = pneg %p154
      %p447 = pneg %p151
      %p448 = pneg %p175
      %p449 = pneg %p172
      %p450 = pneg %p196
      %p451 = pneg %p193
      %p452 = pneg %p217
      %p453 = pneg %p214
      %p454 = pneg %p238
      %p455 = pneg %p235
      %p456 = pneg %p259
      %p457 = pneg %p256
      %p458 = pneg %p280
      %p459 = pneg %p277
      %p460 = pneg %p308
      %p461 = pneg %p305
      %s462 = smul.u32 2, %s28
      %p463 = scmp.lt.s32.totalorder %s27, 1
      %s464 = scalar_select %p463, %s27, 1
      %p465 = scmp.lt.s32.totalorder %s462, 3
      %s466 = scalar_select %p465, %s462, 3
      %s467 = smul.addr %s464, 4
      %s468 = sadd.s32 %s466, %s467
      %s469 = smul.addr %s468, 4
      %s470 = scalar_lea.vmem %s10, %s469
      %s471 = smul.u32 2, %s28
      %p472 = scmp.lt.s32.totalorder %s27, 1
      %s473 = scalar_select %p472, %s27, 1
      %p474 = scmp.lt.s32.totalorder %s471, 3
      %s475 = scalar_select %p474, %s471, 3
      %s476 = smul.addr %s473, 4
      %s477 = sadd.s32 %s475, %s476
      %s478 = smul.addr %s477, 4
      %s479 = scalar_lea.vmem %s0, %s478
      %s480 = smul.u32 2, %s28
      %s481 = smul.u32 2, %s29
      %p482 = scmp.lt.s32.totalorder %s27, 1
      %s483 = scalar_select %p482, %s27, 1
      %p484 = scmp.lt.s32.totalorder %s481, 3
      %s485 = scalar_select %p484, %s481, 3
      %s486 = smul.addr %s483, 4
      %s487 = sadd.s32 %s485, %s486
      %s488 = smul.addr %s487, 4
      %s489 = scalar_lea.vmem %s1, %s488
      %s490 = smul.u32 2, %s29
      %s491 = smul.u32 2, %s29
      %p492 = scmp.lt.s32.totalorder %s27, 1
      %s493 = scalar_select %p492, %s27, 1
      %p494 = scmp.lt.s32.totalorder %s491, 3
      %s495 = scalar_select %p494, %s491, 3
      %s496 = smul.addr %s493, 4
      %s497 = sadd.s32 %s495, %s496
      %s498 = smul.addr %s497, 4
      %s499 = scalar_lea.vmem %s2, %s498
      %s500 = smul.u32 2, %s29
      %s501 = smul.u32 2, %s28
      %p502 = scmp.lt.s32.totalorder %s27, 1
      %s503 = scalar_select %p502, %s27, 1
      %p504 = scmp.lt.s32.totalorder %s501, 3
      %s505 = scalar_select %p504, %s501, 3
      %s506 = smul.addr %s503, 4
      %s507 = sadd.s32 %s505, %s506
      %s508 = smul.addr %s507, 8
      %s509 = scalar_lea.vmem %s3, %s508
      %s510 = smul.u32 2, %s28
      %s511 = smul.u32 2, %s28
      %p512 = scmp.lt.s32.totalorder %s27, 1
      %s513 = scalar_select %p512, %s27, 1
      %p514 = scmp.lt.s32.totalorder %s511, 3
      %s515 = scalar_select %p514, %s511, 3
      %s516 = smul.addr %s513, 4
      %s517 = sadd.s32 %s515, %s516
      %s518 = smul.addr %s517, 4
      %s519 = scalar_lea.vmem %s10, %s518
      %s520 = smul.u32 2, %s28
      %s522 = smul.u32 %s30, 4
      %s523 = scalar_lea.vmem %s8, %s522
      %v524 = vld [vmem:[%s523] sm:$0x7]
      %p525 = scmp.eq.s32.totalorder %s29, 0
      %p526 = scmp.eq.s32.totalorder %s30, 0
      %p527 = pnand %p525, %p526
      %p528 = pneg %p527
      // Predicated region
      $region61: #{t_d_layer_forward.2} parent=59 // pred_check
        _
      $region62: #{t_d_layer_forward.2} parent=59 // pred_check_branch
        %530 = sbr.rel (%p527) target = $region64
      $region63: #{t_d_layer_forward.2} parent=59 // pred_region
        %vm531 = vcmask 261120
        %532 = vst.msk [vmem:[#allocation6] sm:$0xff] %vm531, 0.0
        %533 = vst.msk [vmem:[#allocation6 + $0x8] sm:$0xff] %vm531, 0.0
      $region64: #{t_d_layer_forward.2} parent=59 // pred_fallthru
        _
      // Predicated region
      $region65: #{t_d_layer_forward.2} parent=59 // pred_check
        %p534 = pneg %p525
      $region66: #{t_d_layer_forward.2} parent=59 // pred_check_branch
        %536 = sbr.rel (%p534) target = $region68
      $region67: #{t_d_layer_forward.2} parent=59 // pred_region
        %v537 = vld [vmem:[%s479] sm:$0xf]
        %v538 = vld [vmem:[%s479 + $0x4] sm:$0xf]
        %s539 = smul.addr %s30, 4
        %s540 = scalar_lea.vmem %s4, %s539
        %v541 = vld [vmem:[%s540] sm:$0xf]
        %v542 = vlaneseq
        %v543 = vshrl.u32 %v542, 7
        %v544 = vsub.s32 0, %v543
        %v545 = vrot.slane %v524, %v544
        %v548 = vunpack.c.l.b16 %v537
        %v549 = vunpack.c.l.b16 %v538
        %v550 = vpack.c.b16 %v549, %v548
        %vm551 = vcmask 261120
        %v553 = vsel %vm551, %v550, 0
        %v556 = vsel %vm551, %v541, 0
        %558 = vmatprep.subr.bf16.mxu0 0
        %559 = vmatpush1.bf16.xpose.msra.mxu0 0
        %560 = vmatprep.subr.bf16.mxu0 0
        %561 = vmatpush1.bf16.xpose.msra.mxu0 0
        %562 = vmatprep.subr.bf16.mxu0 0
        %563 = vmatpush1.bf16.xpose.msra.mxu0 0
        %564 = vmatprep.subr.bf16.mxu0 0
        %565 = vmatpush1.bf16.xpose.msra.mxu0 0
        %566 = vmatprep.subr.bf16.mxu0 0
        %567 = vmatpush1.bf16.xpose.msra.mxu0 0
        %568 = vmatprep.subr.bf16.mxu0 0
        %569 = vmatpush1.bf16.xpose.msra.mxu0 0
        %570 = vmatprep.subr.bf16.mxu0 0
        %571 = vmatpush1.bf16.xpose.msra.mxu0 0
        %572 = vmatprep.subr.bf16.mxu0 0
        %573 = vmatpush1.bf16.xpose.msra.mxu0 %v556
        %574 = vmatprep.subr.bf16.mxu0 0
        %575 = vmatpush2.bf16.xpose.msra.mxu0 0
        %576 = vmatprep.subr.bf16.mxu0 0
        %577 = vmatpush2.bf16.xpose.msra.mxu0 0
        %578 = vmatprep.subr.bf16.mxu0 0
        %579 = vmatpush2.bf16.xpose.msra.mxu0 0
        %580 = vmatprep.subr.bf16.mxu0 0
        %581 = vmatpush2.bf16.xpose.msra.mxu0 0
        %582 = vmatprep.subr.bf16.mxu0 0
        %583 = vmatpush2.bf16.xpose.msra.mxu0 0
        %584 = vmatprep.subr.bf16.mxu0 0
        %585 = vmatpush2.bf16.xpose.msra.mxu0 0
        %586 = vmatprep.subr.bf16.mxu0 0
        %587 = vmatpush2.bf16.xpose.msra.mxu0 0
        %588 = vmatprep.subr.bf16.mxu0 0
        %589 = vmatpush2.bf16.xpose.msra.mxu0 0
        %590 = vmatprep.mubr.bf16.mxu0 0
        %591 = vmatmul.mubr.bf16.gmra.mxu0 %v553
        %v592 = vpop.f32.mrf.mxu0
        %v593 = vadd.f32 %v545, %v592
        %v594 = vpop.f32.mrf.mxu0
        %v595 = vpop.f32.mrf.mxu0
        %v596 = vadd.f32 %v545, %v595
        %v597 = vpop.f32.mrf.mxu0
        %598 = vdwg.mxu0
        %v599 = vmul.f32 %v593, 0.35355338
        %v600 = vmul.f32 %v596, 0.35355338
        %v601 = vpack.c.bf16 %v600, %v599
        %v603 = vunpack.c.l.b16 %v601
        %v604 = vunpack.c.h.b16 %v601
        %v605 = vpack.c.b16 %v603, %v603
        %v606 = vpack.c.b16 %v604, %v604
        %s609 = smul.u32 %s30, 2
        %s610 = smul.addr %s609, 4
        %s611 = scalar_lea.vmem [#allocation2], %s610
        %vm612 = vcmask 60416
        %613 = vst.msk [vmem:[%s611] sm:$0xf] %vm612, %v605
        %614 = vst.msk [vmem:[%s611 + $0x4] sm:$0xf] %vm612, %v606
        %s615 = smul.u32 %s30, 16
        %s616 = scalar_lea.vmem [#allocation4], %s615
        %vm617 = vcmask 7168
        %618 = vst.msk [vmem:[%s616] sm:$0xff] %vm617, -inf
        %619 = vst.msk [vmem:[%s616 + $0x8] sm:$0xff] %vm617, -inf
        %s620 = scalar_lea.vmem [#allocation5], %s615
        %621 = vst.msk [vmem:[%s620] sm:$0xff] %vm617, 0.0
        %622 = vst.msk [vmem:[%s620 + $0x8] sm:$0xff] %vm617, 0.0
        %s623 = scalar_lea.vmem [#allocation3], %s615
        %vm624 = vcmask 64512
        %625 = vst.msk [vmem:[%s623] sm:$0xff] %vm624, 0.0
        %626 = vst.msk [vmem:[%s623 + $0x8] sm:$0xff] %vm624, 0.0
      $region68: #{t_d_layer_forward.2} parent=59 // pred_fallthru
        _
      %v627 = vld [vmem:[%s489] sm:$0xf]
      %v628 = vld [vmem:[%s489 + $0x4] sm:$0xf]
      %s629 = smul.addr %s30, 4
      %s630 = scalar_lea.vmem %s5, %s629
      %v631 = vld [vmem:[%s630] sm:$0xf]
      %v632 = vlaneseq
      %v633 = vshrl.u32 %v632, 7
      %v634 = vsub.s32 1, %v633
      %v635 = vrot.slane %v524, %v634
      %v638 = vunpack.c.l.b16 %v627
      %v639 = vunpack.c.l.b16 %v628
      %v640 = vpack.c.b16 %v639, %v638
      %vm641 = vcmask 261120
      %v643 = vsel %vm641, %v640, 0
      %v646 = vsel %vm641, %v631, 0
      %648 = vmatprep.subr.bf16.mxu0 0
      %649 = vmatpush1.bf16.xpose.msra.mxu0 0
      %650 = vmatprep.subr.bf16.mxu0 0
      %651 = vmatpush1.bf16.xpose.msra.mxu0 0
      %652 = vmatprep.subr.bf16.mxu0 0
      %653 = vmatpush1.bf16.xpose.msra.mxu0 0
      %654 = vmatprep.subr.bf16.mxu0 0
      %655 = vmatpush1.bf16.xpose.msra.mxu0 0
      %656 = vmatprep.subr.bf16.mxu0 0
      %657 = vmatpush1.bf16.xpose.msra.mxu0 0
      %658 = vmatprep.subr.bf16.mxu0 0
      %659 = vmatpush1.bf16.xpose.msra.mxu0 0
      %660 = vmatprep.subr.bf16.mxu0 0
      %661 = vmatpush1.bf16.xpose.msra.mxu0 0
      %662 = vmatprep.subr.bf16.mxu0 0
      %663 = vmatpush1.bf16.xpose.msra.mxu0 %v646
      %664 = vmatprep.subr.bf16.mxu0 0
      %665 = vmatpush2.bf16.xpose.msra.mxu0 0
      %666 = vmatprep.subr.bf16.mxu0 0
      %667 = vmatpush2.bf16.xpose.msra.mxu0 0
      %668 = vmatprep.subr.bf16.mxu0 0
      %669 = vmatpush2.bf16.xpose.msra.mxu0 0
      %670 = vmatprep.subr.bf16.mxu0 0
      %671 = vmatpush2.bf16.xpose.msra.mxu0 0
      %672 = vmatprep.subr.bf16.mxu0 0
      %673 = vmatpush2.bf16.xpose.msra.mxu0 0
      %674 = vmatprep.subr.bf16.mxu0 0
      %675 = vmatpush2.bf16.xpose.msra.mxu0 0
      %676 = vmatprep.subr.bf16.mxu0 0
      %677 = vmatpush2.bf16.xpose.msra.mxu0 0
      %678 = vmatprep.subr.bf16.mxu0 0
      %679 = vmatpush2.bf16.xpose.msra.mxu0 0
      %680 = vmatprep.mubr.bf16.mxu0 0
      %681 = vmatmul.mubr.bf16.gmra.mxu0 %v643
      %v682 = vpop.f32.mrf.mxu0
      %v683 = vadd.f32 %v635, %v682
      %v684 = vpop.f32.mrf.mxu0
      %v685 = vpop.f32.mrf.mxu0
      %v686 = vadd.f32 %v635, %v685
      %v687 = vpop.f32.mrf.mxu0
      %688 = vdwg.mxu0
      %v689 = vld [vmem:[%s499] sm:$0xf]
      %v690 = vld [vmem:[%s499 + $0x4] sm:$0xf]
      %s691 = smul.addr %s30, 4
      %s692 = scalar_lea.vmem %s6, %s691
      %v693 = vld [vmem:[%s692] sm:$0xf]
      %v694 = vlaneseq
      %v695 = vshrl.u32 %v694, 7
      %v696 = vsub.s32 2, %v695
      %v697 = vrot.slane %v524, %v696
      %v700 = vunpack.c.l.b16 %v689
      %v701 = vunpack.c.l.b16 %v690
      %v702 = vpack.c.b16 %v701, %v700
      %v704 = vsel %vm641, %v702, 0
      %v707 = vsel %vm641, %v693, 0
      %709 = vmatprep.subr.bf16.mxu0 0
      %710 = vmatpush1.bf16.xpose.msra.mxu0 0
      %711 = vmatprep.subr.bf16.mxu0 0
      %712 = vmatpush1.bf16.xpose.msra.mxu0 0
      %713 = vmatprep.subr.bf16.mxu0 0
      %714 = vmatpush1.bf16.xpose.msra.mxu0 0
      %715 = vmatprep.subr.bf16.mxu0 0
      %716 = vmatpush1.bf16.xpose.msra.mxu0 0
      %717 = vmatprep.subr.bf16.mxu0 0
      %718 = vmatpush1.bf16.xpose.msra.mxu0 0
      %719 = vmatprep.subr.bf16.mxu0 0
      %720 = vmatpush1.bf16.xpose.msra.mxu0 0
      %721 = vmatprep.subr.bf16.mxu0 0
      %722 = vmatpush1.bf16.xpose.msra.mxu0 0
      %723 = vmatprep.subr.bf16.mxu0 0
      %724 = vmatpush1.bf16.xpose.msra.mxu0 %v707
      %725 = vmatprep.subr.bf16.mxu0 0
      %726 = vmatpush2.bf16.xpose.msra.mxu0 0
      %727 = vmatprep.subr.bf16.mxu0 0
      %728 = vmatpush2.bf16.xpose.msra.mxu0 0
      %729 = vmatprep.subr.bf16.mxu0 0
      %730 = vmatpush2.bf16.xpose.msra.mxu0 0
      %731 = vmatprep.subr.bf16.mxu0 0
      %732 = vmatpush2.bf16.xpose.msra.mxu0 0
      %733 = vmatprep.subr.bf16.mxu0 0
      %734 = vmatpush2.bf16.xpose.msra.mxu0 0
      %735 = vmatprep.subr.bf16.mxu0 0
      %736 = vmatpush2.bf16.xpose.msra.mxu0 0
      %737 = vmatprep.subr.bf16.mxu0 0
      %738 = vmatpush2.bf16.xpose.msra.mxu0 0
      %739 = vmatprep.subr.bf16.mxu0 0
      %740 = vmatpush2.bf16.xpose.msra.mxu0 0
      %741 = vmatprep.mubr.bf16.mxu0 0
      %742 = vmatmul.mubr.bf16.gmra.mxu0 %v704
      %v743 = vpop.f32.mrf.mxu0
      %v744 = vadd.f32 %v697, %v743
      %v745 = vpop.f32.mrf.mxu0
      %v746 = vpop.f32.mrf.mxu0
      %v747 = vadd.f32 %v697, %v746
      %v748 = vpop.f32.mrf.mxu0
      %749 = vdwg.mxu0
      %s750 = smul.u32 %s30, 2
      %s751 = smul.addr %s750, 4
      %s752 = scalar_lea.vmem [#allocation2], %s751
      %v753 = vld [vmem:[%s752] sm:$0xf]
      %v754 = vld [vmem:[%s752 + $0x4] sm:$0xf]
      %v755 = vpack.c.bf16 %v686, %v683
      %v758 = vunpack.c.l.b16 %v753
      %v759 = vunpack.c.l.b16 %v754
      %v760 = vpack.c.b16 %v759, %v758
      %vm761 = vcmask 64512
      %v763 = vsel %vm761, %v760, 0
      %v766 = vsel %vm761, %v755, 0
      %768 = vmatprep.subr.bf16.mxu0 0
      %769 = vmatpush1.bf16.xpose.msra.mxu0 0
      %770 = vmatprep.subr.bf16.mxu0 0
      %771 = vmatpush1.bf16.xpose.msra.mxu0 0
      %772 = vmatprep.subr.bf16.mxu0 0
      %773 = vmatpush1.bf16.xpose.msra.mxu0 0
      %774 = vmatprep.subr.bf16.mxu0 0
      %775 = vmatpush1.bf16.xpose.msra.mxu0 0
      %776 = vmatprep.subr.bf16.mxu0 0
      %777 = vmatpush1.bf16.xpose.msra.mxu0 0
      %778 = vmatprep.subr.bf16.mxu0 0
      %779 = vmatpush1.bf16.xpose.msra.mxu0 0
      %780 = vmatprep.subr.bf16.mxu0 0
      %781 = vmatpush1.bf16.xpose.msra.mxu0 0
      %782 = vmatprep.subr.bf16.mxu0 0
      %783 = vmatpush1.bf16.xpose.msra.mxu0 %v766
      %784 = vmatprep.subr.bf16.mxu0 0
      %785 = vmatpush2.bf16.xpose.msra.mxu0 0
      %786 = vmatprep.subr.bf16.mxu0 0
      %787 = vmatpush2.bf16.xpose.msra.mxu0 0
      %788 = vmatprep.subr.bf16.mxu0 0
      %789 = vmatpush2.bf16.xpose.msra.mxu0 0
      %790 = vmatprep.subr.bf16.mxu0 0
      %791 = vmatpush2.bf16.xpose.msra.mxu0 0
      %792 = vmatprep.subr.bf16.mxu0 0
      %793 = vmatpush2.bf16.xpose.msra.mxu0 0
      %794 = vmatprep.subr.bf16.mxu0 0
      %795 = vmatpush2.bf16.xpose.msra.mxu0 0
      %796 = vmatprep.subr.bf16.mxu0 0
      %797 = vmatpush2.bf16.xpose.msra.mxu0 0
      %798 = vmatprep.subr.bf16.mxu0 0
      %799 = vmatpush2.bf16.xpose.msra.mxu0 0
      %800 = vmatprep.mubr.bf16.mxu0 0
      %801 = vmatmul.mubr.bf16.gmra.mxu0 %v763
      %v802 = vpop.f32.mrf.mxu0
      %v803 = vadd.f32 0.0, %v802
      %v804 = vpop.f32.mrf.mxu0
      %v805 = vpop.f32.mrf.mxu0
      %v806 = vadd.f32 0.0, %v805
      %v807 = vpop.f32.mrf.mxu0
      %808 = vdwg.mxu0
      %s809 = smul.u32 %s30, 16
      %s810 = scalar_lea.vmem [#allocation4], %s809
      %v811 = vld [vmem:[%s810] sm:$0xff]
      %v812 = vld [vmem:[%s810 + $0x8] sm:$0xff]
      %vm813 = vcmask 130048
      %v814 = vsel %vm813, %v803, -inf
      %815 = vmax.xlane.f32.xlu0 %v814
      %v816 = vpop.xlane.xlu0 %815
      %v817 = vsel %vm813, %v806, -inf
      %818 = vmax.xlane.f32.xlu0 %v817
      %v819 = vpop.xlane.xlu0 %818
      %v820 = vmax.f32 %v811, %v816
      %v821 = vmax.f32 %v812, %v819
      %v822 = vsub.f32 %v811, %v820
      %v823 = vsub.f32 %v812, %v821
      %v824 = vmul.f32 %v822, 1.442695
      %v825 = vpow.pop %v824
      %v826 = vmul.f32 %v823, 1.442695
      %v827 = vpow.pop %v826
      %829 = vset.pattern.permute.xlu0 0
      %830 = vperm.xlu0 %829, %v820
      %v831 = vpop.permute.xlu0 %830
      %834 = vset.pattern.permute.xlu0 0
      %835 = vperm.xlu0 %834, %v821
      %v836 = vpop.permute.xlu0 %835
      %v838 = vsub.f32 %v803, %v831
      %v839 = vsub.f32 %v806, %v836
      %v840 = vmul.f32 %v838, 1.442695
      %v841 = vpow.pop %v840
      %v842 = vmul.f32 %v839, 1.442695
      %v843 = vpow.pop %v842
      %s844 = scalar_lea.vmem [#allocation5], %s809
      %v845 = vld [vmem:[%s844] sm:$0xff]
      %v846 = vld [vmem:[%s844 + $0x8] sm:$0xff]
      %v847 = vmul.f32 %v825, %v845
      %v848 = vmul.f32 %v827, %v846
      %v849 = vsel %vm813, %v841, 0.0
      %850 = vadd.xlane.f32.xlu0 %v849
      %v851 = vpop.xlane.xlu0 %850
      %v852 = vsel %vm813, %v843, 0.0
      %853 = vadd.xlane.f32.xlu0 %v852
      %v854 = vpop.xlane.xlu0 %853
      %v855 = vadd.f32 %v847, %v851
      %v856 = vadd.f32 %v848, %v854
      %vm857 = vcmask 7168
      %858 = vst.msk [vmem:[%s844] sm:$0xff] %vm857, %v855
      %859 = vst.msk [vmem:[%s844 + $0x8] sm:$0xff] %vm857, %v856
      %s860 = scalar_lea.vmem [#allocation3], %s809
      %v861 = vld [vmem:[%s860] sm:$0xff]
      %v862 = vld [vmem:[%s860 + $0x8] sm:$0xff]
      %864 = vset.pattern.permute.xlu0 0
      %865 = vperm.xlu0 %864, %v825
      %v866 = vpop.permute.xlu0 %865
      %869 = vset.pattern.permute.xlu0 0
      %870 = vperm.xlu0 %869, %v827
      %v871 = vpop.permute.xlu0 %870
      %v873 = vmul.f32 %v866, %v861
      %v874 = vmul.f32 %v871, %v862
      %v875 = vpack.c.bf16 %v843, %v841
      %v876 = vpack.c.bf16 %v747, %v744
      %v878 = vsel %vm813, %v875, 0
      %880 = vmatprep.subr.bf16.mxu0 0
      %881 = vmatpush1.bf16.msra.mxu0 0
      %882 = vmatprep.subr.bf16.mxu0 0
      %883 = vmatpush1.bf16.msra.mxu0 0
      %884 = vmatprep.subr.bf16.mxu0 0
      %885 = vmatpush1.bf16.msra.mxu0 0
      %886 = vmatprep.subr.bf16.mxu0 0
      %887 = vmatpush1.bf16.msra.mxu0 0
      %888 = vmatprep.subr.bf16.mxu0 0
      %889 = vmatpush1.bf16.msra.mxu0 0
      %890 = vmatprep.subr.bf16.mxu0 0
      %891 = vmatpush1.bf16.msra.mxu0 0
      %892 = vmatprep.subr.bf16.mxu0 0
      %893 = vmatpush1.bf16.msra.mxu0 0
      %894 = vmatprep.subr.bf16.mxu0 0
      %895 = vmatpush1.bf16.msra.mxu0 %v876
      %896 = vmatprep.subr.bf16.mxu0 0
      %897 = vmatpush2.bf16.msra.mxu0 0
      %898 = vmatprep.subr.bf16.mxu0 0
      %899 = vmatpush2.bf16.msra.mxu0 0
      %900 = vmatprep.subr.bf16.mxu0 0
      %901 = vmatpush2.bf16.msra.mxu0 0
      %902 = vmatprep.subr.bf16.mxu0 0
      %903 = vmatpush2.bf16.msra.mxu0 0
      %904 = vmatprep.subr.bf16.mxu0 0
      %905 = vmatpush2.bf16.msra.mxu0 0
      %906 = vmatprep.subr.bf16.mxu0 0
      %907 = vmatpush2.bf16.msra.mxu0 0
      %908 = vmatprep.subr.bf16.mxu0 0
      %909 = vmatpush2.bf16.msra.mxu0 0
      %910 = vmatprep.subr.bf16.mxu0 0
      %911 = vmatpush2.bf16.msra.mxu0 0
      %912 = vmatprep.mubr.bf16.mxu0 0
      %913 = vmatmul.mubr.bf16.gmra.mxu0 %v878
      %v914 = vpop.f32.mrf.mxu0
      %v915 = vadd.f32 0.0, %v914
      %v916 = vpop.f32.mrf.mxu0
      %v917 = vpop.f32.mrf.mxu0
      %v918 = vadd.f32 0.0, %v917
      %v919 = vpop.f32.mrf.mxu0
      %920 = vdwg.mxu0
      %v921 = vadd.f32 %v873, %v915
      %v922 = vadd.f32 %v874, %v918
      %923 = vst.msk [vmem:[%s860] sm:$0xff] %vm761, %v921
      %924 = vst.msk [vmem:[%s860 + $0x8] sm:$0xff] %vm761, %v922
      %925 = vst.msk [vmem:[%s810] sm:$0xff] %vm857, %v820
      %926 = vst.msk [vmem:[%s810 + $0x8] sm:$0xff] %vm857, %v821
      %p927 = scmp.eq.s32.totalorder %s29, 1
      // Predicated region
      $region69: #{t_d_layer_forward.2} parent=59 // pred_check
        %p928 = pneg %p927
      $region70: #{t_d_layer_forward.2} parent=59 // pred_check_branch
        %930 = sbr.rel (%p928) target = $region72
      $region71: #{t_d_layer_forward.2} parent=59 // pred_region
        %v931 = vld [vmem:[%s860] sm:$0xff]
        %v932 = vld [vmem:[%s860 + $0x8] sm:$0xff]
        %v933 = vld [vmem:[%s844] sm:$0xff]
        %v934 = vld [vmem:[%s844 + $0x8] sm:$0xff]
        %v935 = vrcp.pop %v933
        %v936 = vrcp.pop %v934
        %938 = vset.pattern.permute.xlu0 0
        %939 = vperm.xlu0 %938, %v935
        %v940 = vpop.permute.xlu0 %939
        %943 = vset.pattern.permute.xlu0 0
        %944 = vperm.xlu0 %943, %v936
        %v945 = vpop.permute.xlu0 %944
        %v947 = vmul.f32 %v931, %v940
        %v948 = vmul.f32 %v932, %v945
        %v949 = vld [vmem:[#allocation6] sm:$0xff]
        %v950 = vld [vmem:[#allocation6 + $0x8] sm:$0xff]
        %v951 = vpack.c.bf16 %v948, %v947
        %s952 = smul.addr %s30, 4
        %s953 = scalar_lea.vmem %s7, %s952
        %v954 = vld [vmem:[%s953] sm:$0xf]
        %v956 = vsel %vm761, %v951, 0
        %vm958 = vcmask 1043456
        %v960 = vsel %vm958, %v954, 0
        %962 = vmatprep.subr.bf16.mxu0 0
        %963 = vmatpush1.bf16.msra.mxu0 0
        %964 = vmatprep.subr.bf16.mxu0 0
        %965 = vmatpush1.bf16.msra.mxu0 0
        %966 = vmatprep.subr.bf16.mxu0 0
        %967 = vmatpush1.bf16.msra.mxu0 0
        %968 = vmatprep.subr.bf16.mxu0 0
        %969 = vmatpush1.bf16.msra.mxu0 0
        %970 = vmatprep.subr.bf16.mxu0 0
        %971 = vmatpush1.bf16.msra.mxu0 0
        %972 = vmatprep.subr.bf16.mxu0 0
        %973 = vmatpush1.bf16.msra.mxu0 0
        %974 = vmatprep.subr.bf16.mxu0 0
        %975 = vmatpush1.bf16.msra.mxu0 0
        %976 = vmatprep.subr.bf16.mxu0 0
        %977 = vmatpush1.bf16.msra.mxu0 %v960
        %978 = vmatprep.subr.bf16.mxu0 0
        %979 = vmatpush2.bf16.msra.mxu0 0
        %980 = vmatprep.subr.bf16.mxu0 0
        %981 = vmatpush2.bf16.msra.mxu0 0
        %982 = vmatprep.subr.bf16.mxu0 0
        %983 = vmatpush2.bf16.msra.mxu0 0
        %984 = vmatprep.subr.bf16.mxu0 0
        %985 = vmatpush2.bf16.msra.mxu0 0
        %986 = vmatprep.subr.bf16.mxu0 0
        %987 = vmatpush2.bf16.msra.mxu0 0
        %988 = vmatprep.subr.bf16.mxu0 0
        %989 = vmatpush2.bf16.msra.mxu0 0
        %990 = vmatprep.subr.bf16.mxu0 0
        %991 = vmatpush2.bf16.msra.mxu0 0
        %992 = vmatprep.subr.bf16.mxu0 0
        %993 = vmatpush2.bf16.msra.mxu0 0
        %994 = vmatprep.mubr.bf16.mxu0 0
        %995 = vmatmul.mubr.bf16.gmra.mxu0 %v956
        %v996 = vpop.f32.mrf.mxu0
        %v997 = vadd.f32 0.0, %v996
        %v998 = vpop.f32.mrf.mxu0
        %v999 = vpop.f32.mrf.mxu0
        %v1000 = vadd.f32 0.0, %v999
        %v1001 = vpop.f32.mrf.mxu0
        %1002 = vdwg.mxu0
        %v1003 = vadd.f32 %v949, %v997
        %v1004 = vadd.f32 %v950, %v1000
        %1005 = vst.msk [vmem:[#allocation6] sm:$0xff] %vm641, %v1003
        %1006 = vst.msk [vmem:[#allocation6 + $0x8] sm:$0xff] %vm641, %v1004
      $region72: #{t_d_layer_forward.2} parent=59 // pred_fallthru
        _
      %p1007 = scmp.eq.s32.totalorder %s30, 3
      %p1008 = pnand %p927, %p1007
      %p1009 = pneg %p1008
      // Predicated region
      $region73: #{t_d_layer_forward.2} parent=59 // pred_check
        _
      $region74: #{t_d_layer_forward.2} parent=59 // pred_check_branch
        %1011 = sbr.rel (%p1008) target = $region76
      $region75: #{t_d_layer_forward.2} parent=59 // pred_region
        %v1012 = vld [vmem:[#allocation6] sm:$0xff]
        %v1013 = vld [vmem:[#allocation6 + $0x8] sm:$0xff]
        %v1014 = vld [vmem:[%s9] sm:$0x1]
        %v1015 = vlaneseq
        %v1016 = vshrl.u32 %v1015, 7
        %v1017 = vsub.s32 0, %v1016
        %v1018 = vrot.slane %v1014, %v1017
        %v1019 = vadd.f32 %v1012, %v1018
        %v1020 = vadd.f32 %v1013, %v1018
        %v1021 = vld [vmem:[%s509] sm:$0xff]
        %v1022 = vld [vmem:[%s509 + $0x8] sm:$0xff]
        %v1023 = vadd.f32 %v1019, %v1021
        %v1024 = vadd.f32 %v1020, %v1022
        %v1025 = vsel %vm641, %v1023, 0.0
        %1026 = vadd.xlane.f32.xlu0 %v1025
        %v1027 = vpop.xlane.xlu0 %1026
        %v1028 = vsel %vm641, %v1024, 0.0
        %1029 = vadd.xlane.f32.xlu0 %v1028
        %v1030 = vpop.xlane.xlu0 %1029
        %v1031 = vrcp.pop 32.0
        %v1032 = vmul.f32 %v1027, %v1031
        %v1033 = vmul.f32 %v1030, %v1031
        %v1034 = vsub.f32 %v1023, %v1032
        %v1035 = vsub.f32 %v1024, %v1033
        %v1036 = vmul.f32 %v1034, %v1034
        %v1037 = vmul.f32 %v1035, %v1035
        %v1038 = vsel %vm641, %v1036, 0.0
        %1039 = vadd.xlane.f32.xlu0 %v1038
        %v1040 = vpop.xlane.xlu0 %1039
        %v1041 = vsel %vm641, %v1037, 0.0
        %1042 = vadd.xlane.f32.xlu0 %v1041
        %v1043 = vpop.xlane.xlu0 %1042
        %v1044 = vmul.f32 %v1040, %v1031
        %v1045 = vmul.f32 %v1043, %v1031
        %v1046 = vadd.f32 %v1044, 1e-05
        %v1047 = vadd.f32 %v1045, 1e-05
        %v1048 = vrsqrt.pop %v1046
        %v1049 = vrsqrt.pop %v1047
        %v1050 = vmul.f32 %v1034, %v1048
        %v1051 = vmul.f32 %v1035, %v1049
        %v1052 = vld [vmem:[%s9 + $0x1] sm:$0x1]
        %v1053 = vlaneseq
        %v1054 = vshrl.u32 %v1053, 7
        %v1055 = vsub.s32 0, %v1054
        %v1056 = vrot.slane %v1052, %v1055
        %v1057 = vmul.f32 %v1050, %v1056
        %v1058 = vmul.f32 %v1051, %v1056
        %v1059 = vld [vmem:[%s9 + $0x2] sm:$0x1]
        %v1060 = vlaneseq
        %v1061 = vshrl.u32 %v1060, 7
        %v1062 = vsub.s32 0, %v1061
        %v1063 = vrot.slane %v1059, %v1062
        %v1064 = vadd.f32 %v1057, %v1063
        %v1065 = vadd.f32 %v1058, %v1063
        %v1066 = vpack.c.bf16 %v1065, %v1064
        %v1068 = vunpack.c.l.b16 %v1066
        %v1069 = vunpack.c.h.b16 %v1066
        %v1070 = vpack.c.b16 %v1068, %v1068
        %v1071 = vpack.c.b16 %v1069, %v1069
        %vm1074 = vcmask 257024
        %1075 = vst.msk [vmem:[%s519] sm:$0xf] %vm1074, %v1070
        %1076 = vst.msk [vmem:[%s519 + $0x4] sm:$0xf] %vm1074, %v1071
      $region76: #{t_d_layer_forward.2} parent=59 // pred_fallthru
        _
      %s1077 = smul.u32 2, %s28
      %p1078 = scmp.lt.s32.totalorder %s27, 1
      %s1079 = scalar_select %p1078, %s27, 1
      %p1080 = scmp.lt.s32.totalorder %s1077, 3
      %s1081 = scalar_select %p1080, %s1077, 3
      %s1082 = smul.addr %s1079, 4
      %s1083 = sadd.s32 %s1081, %s1082
      %s1084 = smul.addr %s1083, 4
      %s1085 = scalar_lea.vmem %s10, %s1084
      // Predicated region
      $region77: #{t_d_layer_forward.2} parent=59 // pred_check
        %p1086 = pneg %p305
      $region78: #{t_d_layer_forward.2} parent=59 // pred_check_branch
        %1088 = sbr.rel (%p1086) target = $region80
      $region79: #{t_d_layer_forward.2} parent=59 // pred_region
        %s1089 = smul.u32 2, %s28
      $region80: #{t_d_layer_forward.2} parent=59 // pred_fallthru
        _
    $region60: #{t_d_layer_forward.2} parent=5 // pred_fallthru
      _
    %p1090 = scmp.le.s32.totalorder 2, %s16
    // Predicated region
    $region81: #{t_d_layer_forward.2} parent=5 // pred_check
      %p1091 = pneg %p1090
    $region82: #{t_d_layer_forward.2} parent=5 // pred_check_branch
      %1093 = sbr.rel (%p1091) target = $region84
    $region83: #{t_d_layer_forward.2} parent=5 // pred_region
      %s1094 = ssub.s32 %s16, 2
      // Predicated region
      $region85: #{t_d_layer_forward.2} parent=83 // pred_check
        %p1095 = pneg %p311
      $region86: #{t_d_layer_forward.2} parent=83 // pred_check_branch
        %1097 = sbr.rel (%p1095) target = $region88
      $region87: #{t_d_layer_forward.2} parent=83 // pred_region
        %s1098 = smul.u32 2, %s32
        %p1099 = scmp.lt.s32.totalorder %s31, 1
        %s1100 = scalar_select %p1099, %s31, 1
        %p1101 = scmp.lt.s32.totalorder %s1098, 3
        %s1102 = scalar_select %p1101, %s1098, 3
        %s1103 = smul.addr %s1100, 4
        %s1104 = sadd.s32 %s1102, %s1103
        %s1105 = smul.addr %s1104, 4
        %s1106 = scalar_lea.vmem %s10, %s1105
      $region88: #{t_d_layer_forward.2} parent=83 // pred_fallthru
        _
    $region84: #{t_d_layer_forward.2} parent=5 // pred_fallthru
      _
  $region6: #{t_d_layer_forward.2} parent=0 // loop_footer
    %s20 = sadd.s32 1, %s16
  $region7: #{t_d_layer_forward.2} parent=0 // loop_footer_branch
    %15 = sbr.rel target = $region3
  $region8: #{t_d_layer_forward.2} parent=0 // loop_exit
    _

// kernel: t_d_layer_forward.3
$region0: #{t_d_layer_forward.3}
  #allocation0 [shape = 'u32[]', space=smem, size = 0x4, offset = 0x4, fixed_abs, tag = 'smem constant byte address 0x4 - core index']
  #allocation1 [shape = 'u32[144,128]{1,0:T(1,128)}', space=vmem, size = 0x12000, scoped, tag = 'internal scratch']
  #allocation2 [shape = 'f32[32,32]{1,0:T(8,128)}', space=vmem, size = 0x4000, scoped, tag = 'scratch operand']
  %s0 = inlined_call_operand.vmem [shape: bf16[64,32], index: 0, kind: input, shape index: {}]
  %s1 = inlined_call_operand.vmem [shape: bf16[256,32], index: 1, kind: input, shape index: {}]
  %s2 = inlined_call_operand.vmem [shape: f32[1,256], index: 2, kind: input, shape index: {}]
  %s3 = inlined_call_operand.vmem [shape: bf16[32,256], index: 3, kind: input, shape index: {}]
  %s4 = inlined_call_operand.vmem [shape: f32[1,32], index: 4, kind: input, shape index: {}]
  %s5 = inlined_call_operand.vmem [shape: f32[1,32], index: 5, kind: input, shape index: {}]
  %s6 = inlined_call_operand.vmem [shape: f32[1,32], index: 6, kind: input, shape index: {}]
  %s7 = inlined_call_operand.vmem [shape: f32[64,32], index: 7, kind: output, shape index: {}]
  %s8 = sld [smem:[#allocation0]]
  $region110: #{t_d_layer_forward.3} parent=0
    _
  %s10 = ssub.s32 1, %s8
  %s11 = scalar_select 0, %s10, %s8
  $region1: #{t_d_layer_forward.3} parent=0
    #allocation3 [shape = 'u8[16384]{0}', space=vmem, size = 0x4000, scoped, tag = 'input window, operand 3']
    loop: start=0, step=1, limit=6
    $region2: #{t_d_layer_forward.3} parent=1 // loop_pre_header
      _
    $region3: #{t_d_layer_forward.3} parent=1 // loop_header
      %s13 = sphi 0, %s17
      %p14 = scmp.ge.s32.totalorder %s13, 6
      %s20 = sphi 0, %s32
      %s21 = sphi 0, %s28
      %s22 = sphi 0, %s20
      %s23 = sphi 0, %s21
      %s24 = sphi 0, %s22
      %s25 = sphi 0, %s23
      %s35 = sphi 0, %s37
      %s38 = sphi 0, %s35
      %s39 = sphi 0, %s38
      %s55 = sphi 0, %s39
      %s61 = sphi 0, %s63
      %s64 = sphi 0, %s61
      %s65 = sphi 0, %s64
      %s81 = sphi 0, %s65
      %s87 = sphi 0, %s89
      %s90 = sphi 0, %s87
      %s91 = sphi 0, %s90
      %s107 = sphi 0, %s91
      %s113 = sphi 0, %s115
      %s116 = sphi 0, %s113
      %s117 = sphi 0, %s116
      %s133 = sphi 0, %s117
      %s137 = sphi 0, %s137
      %s139 = sphi 0, %s137
      %s140 = sphi 0, %s139
      %s154 = sphi 0, %s140
      %s158 = sphi 0, %s158
      %s160 = sphi 0, %s158
      %s161 = sphi 0, %s160
      %s175 = sphi 0, %s161
      %s179 = sphi 0, %s179
      %s181 = sphi 0, %s179
      %s182 = sphi 0, %s181
      %s196 = sphi 0, %s182
      %s202 = sphi 0, %s204
      %s205 = sphi 0, %s202
      %s206 = sphi 0, %s205
      %s222 = sphi 0, %s206
    $region4: #{t_d_layer_forward.3} parent=1 // loop_header_branch
      %16 = sbr.rel (%p14) target = $region8
    $region5: #{t_d_layer_forward.3} parent=1 // loop_body
      %s18 = ssub.s32 %s13, 1
      %s19 = ssub.s32 %s13, 2
      %s26 = sadd.s32 1, %s21
      %p27 = scmp.ge.s32.totalorder %s26, 2
      %s28 = scalar_select %p27, 0, %s26
      %s29 = sadd.s32 1, %s20
      %s30 = scalar_select %p27, %s29, %s20
      %p31 = scmp.ge.s32.totalorder %s30, 2
      %s32 = scalar_select %p31, 0, %s30
      %s33 = ssub.s32 %s20, %s32
      %p34 = scmp.eq.s32.totalorder %s33, 0
      %s36 = sadd.s32 %s35, 1
      %s37 = scalar_select %p34, %s35, %s36
      %p40 = pneg %p34
      %p41 = scmp.eq.s32.totalorder %s13, 3
      %p42 = por %p40, %p41
      %p43 = scmp.ne.s32.totalorder %s35, %s38
      %p44 = scmp.eq.s32.totalorder %s13, 0
      %p45 = por %p43, %p44
      %p46 = scmp.ne.s32.totalorder %s35, %s38
      %p47 = scmp.eq.s32.totalorder %s18, 3
      %p48 = por %p46, %p47
      %p49 = scmp.ne.s32.totalorder %s38, %s39
      %p50 = scmp.eq.s32.totalorder %s18, 0
      %p51 = por %p49, %p50
      %p52 = scmp.ne.s32.totalorder %s38, %s39
      %p53 = scmp.eq.s32.totalorder %s19, 3
      %p54 = por %p52, %p53
      %p56 = scmp.ne.s32.totalorder %s39, %s55
      %p57 = scmp.eq.s32.totalorder %s19, 0
      %p58 = por %p56, %p57
      %s59 = ssub.s32 %s21, %s28
      %p60 = scmp.eq.s32.totalorder %s59, 0
      %s62 = sadd.s32 %s61, 1
      %s63 = scalar_select %p60, %s61, %s62
      %p66 = pneg %p60
      %p67 = scmp.eq.s32.totalorder %s13, 3
      %p68 = por %p66, %p67
      %p69 = scmp.ne.s32.totalorder %s61, %s64
      %p70 = scmp.eq.s32.totalorder %s13, 0
      %p71 = por %p69, %p70
      %p72 = scmp.ne.s32.totalorder %s61, %s64
      %p73 = scmp.eq.s32.totalorder %s18, 3
      %p74 = por %p72, %p73
      %p75 = scmp.ne.s32.totalorder %s64, %s65
      %p76 = scmp.eq.s32.totalorder %s18, 0
      %p77 = por %p75, %p76
      %p78 = scmp.ne.s32.totalorder %s64, %s65
      %p79 = scmp.eq.s32.totalorder %s19, 3
      %p80 = por %p78, %p79
      %p82 = scmp.ne.s32.totalorder %s65, %s81
      %p83 = scmp.eq.s32.totalorder %s19, 0
      %p84 = por %p82, %p83
      %s85 = ssub.s32 %s21, %s28
      %p86 = scmp.eq.s32.totalorder %s85, 0
      %s88 = sadd.s32 %s87, 1
      %s89 = scalar_select %p86, %s87, %s88
      %p92 = pneg %p86
      %p93 = scmp.eq.s32.totalorder %s13, 3
      %p94 = por %p92, %p93
      %p95 = scmp.ne.s32.totalorder %s87, %s90
      %p96 = scmp.eq.s32.totalorder %s13, 0
      %p97 = por %p95, %p96
      %p98 = scmp.ne.s32.totalorder %s87, %s90
      %p99 = scmp.eq.s32.totalorder %s18, 3
      %p100 = por %p98, %p99
      %p101 = scmp.ne.s32.totalorder %s90, %s91
      %p102 = scmp.eq.s32.totalorder %s18, 0
      %p103 = por %p101, %p102
      %p104 = scmp.ne.s32.totalorder %s90, %s91
      %p105 = scmp.eq.s32.totalorder %s19, 3
      %p106 = por %p104, %p105
      %p108 = scmp.ne.s32.totalorder %s91, %s107
      %p109 = scmp.eq.s32.totalorder %s19, 0
      %p110 = por %p108, %p109
      %s111 = ssub.s32 %s21, %s28
      %p112 = scmp.eq.s32.totalorder %s111, 0
      %s114 = sadd.s32 %s113, 1
      %s115 = scalar_select %p112, %s113, %s114
      %p118 = pneg %p112
      %p119 = scmp.eq.s32.totalorder %s13, 3
      %p120 = por %p118, %p119
      %p121 = scmp.ne.s32.totalorder %s113, %s116
      %p122 = scmp.eq.s32.totalorder %s13, 0
      %p123 = por %p121, %p122
      %p124 = scmp.ne.s32.totalorder %s113, %s116
      %p125 = scmp.eq.s32.totalorder %s18, 3
      %p126 = por %p124, %p125
      %p127 = scmp.ne.s32.totalorder %s116, %s117
      %p128 = scmp.eq.s32.totalorder %s18, 0
      %p129 = por %p127, %p128
      %p130 = scmp.ne.s32.totalorder %s116, %s117
      %p131 = scmp.eq.s32.totalorder %s19, 3
      %p132 = por %p130, %p131
      %p134 = scmp.ne.s32.totalorder %s117, %s133
      %p135 = scmp.eq.s32.totalorder %s19, 0
      %p136 = por %p134, %p135
      %s138 = sadd.s32 %s137, 1
      %p141 = scmp.eq.s32.totalorder %s13, 3
      %p142 = scmp.ne.s32.totalorder %s137, %s139
      %p143 = scmp.eq.s32.totalorder %s13, 0
      %p144 = por %p142, %p143
      %p145 = scmp.ne.s32.totalorder %s137, %s139
      %p146 = scmp.eq.s32.totalorder %s18, 3
      %p147 = por %p145, %p146
      %p148 = scmp.ne.s32.totalorder %s139, %s140
      %p149 = scmp.eq.s32.totalorder %s18, 0
      %p150 = por %p148, %p149
      %p151 = scmp.ne.s32.totalorder %s139, %s140
      %p152 = scmp.eq.s32.totalorder %s19, 3
      %p153 = por %p151, %p152
      %p155 = scmp.ne.s32.totalorder %s140, %s154
      %p156 = scmp.eq.s32.totalorder %s19, 0
      %p157 = por %p155, %p156
      %s159 = sadd.s32 %s158, 1
      %p162 = scmp.eq.s32.totalorder %s13, 3
      %p163 = scmp.ne.s32.totalorder %s158, %s160
      %p164 = scmp.eq.s32.totalorder %s13, 0
      %p165 = por %p163, %p164
      %p166 = scmp.ne.s32.totalorder %s158, %s160
      %p167 = scmp.eq.s32.totalorder %s18, 3
      %p168 = por %p166, %p167
      %p169 = scmp.ne.s32.totalorder %s160, %s161
      %p170 = scmp.eq.s32.totalorder %s18, 0
      %p171 = por %p169, %p170
      %p172 = scmp.ne.s32.totalorder %s160, %s161
      %p173 = scmp.eq.s32.totalorder %s19, 3
      %p174 = por %p172, %p173
      %p176 = scmp.ne.s32.totalorder %s161, %s175
      %p177 = scmp.eq.s32.totalorder %s19, 0
      %p178 = por %p176, %p177
      %s180 = sadd.s32 %s179, 1
      %p183 = scmp.eq.s32.totalorder %s13, 3
      %p184 = scmp.ne.s32.totalorder %s179, %s181
      %p185 = scmp.eq.s32.totalorder %s13, 0
      %p186 = por %p184, %p185
      %p187 = scmp.ne.s32.totalorder %s179, %s181
      %p188 = scmp.eq.s32.totalorder %s18, 3
      %p189 = por %p187, %p188
      %p190 = scmp.ne.s32.totalorder %s181, %s182
      %p191 = scmp.eq.s32.totalorder %s18, 0
      %p192 = por %p190, %p191
      %p193 = scmp.ne.s32.totalorder %s181, %s182
      %p194 = scmp.eq.s32.totalorder %s19, 3
      %p195 = por %p193, %p194
      %p197 = scmp.ne.s32.totalorder %s182, %s196
      %p198 = scmp.eq.s32.totalorder %s19, 0
      %p199 = por %p197, %p198
      %s200 = ssub.s32 %s20, %s32
      %p201 = scmp.eq.s32.totalorder %s200, 0
      %s203 = sadd.s32 %s202, 1
      %s204 = scalar_select %p201, %s202, %s203
      %p207 = pneg %p201
      %p208 = scmp.eq.s32.totalorder %s13, 3
      %p209 = por %p207, %p208
      %p210 = scmp.ne.s32.totalorder %s202, %s205
      %p211 = scmp.eq.s32.totalorder %s13, 0
      %p212 = por %p210, %p211
      %p213 = scmp.ne.s32.totalorder %s202, %s205
      %p214 = scmp.eq.s32.totalorder %s18, 3
      %p215 = por %p213, %p214
      %p216 = scmp.ne.s32.totalorder %s205, %s206
      %p217 = scmp.eq.s32.totalorder %s18, 0
      %p218 = por %p216, %p217
      %p219 = scmp.ne.s32.totalorder %s205, %s206
      %p220 = scmp.eq.s32.totalorder %s19, 3
      %p221 = por %p219, %p220
      %p223 = scmp.ne.s32.totalorder %s206, %s222
      %p224 = scmp.eq.s32.totalorder %s19, 0
      %p225 = por %p223, %p224
      %p226 = scmp.le.s32.totalorder 1, %s13
      %p227 = scmp.lt.s32.totalorder %s13, 5
      %p228 = pnand %p226, %p227
      %p229 = pneg %p228
      // Predicated region
      $region9: #{t_d_layer_forward.3} parent=5 // pred_check
        _
      $region10: #{t_d_layer_forward.3} parent=5 // pred_check_branch
        %231 = sbr.rel (%p228) target = $region12
      $region11: #{t_d_layer_forward.3} parent=5 // pred_region
        %s232 = ssub.s32 %s13, 1
        // Predicated region
        $region13: #{t_d_layer_forward.3} parent=11 // pred_check
          %p233 = pneg %p150
        $region14: #{t_d_layer_forward.3} parent=11 // pred_check_branch
          %235 = sbr.rel (%p233) target = $region16
        $region15: #{t_d_layer_forward.3} parent=11 // pred_region
          _
        $region16: #{t_d_layer_forward.3} parent=11 // pred_fallthru
          _
        // Predicated region
        $region17: #{t_d_layer_forward.3} parent=11 // pred_check
          %p236 = pneg %p171
        $region18: #{t_d_layer_forward.3} parent=11 // pred_check_branch
          %238 = sbr.rel (%p236) target = $region20
        $region19: #{t_d_layer_forward.3} parent=11 // pred_region
          _
        $region20: #{t_d_layer_forward.3} parent=11 // pred_fallthru
          _
        // Predicated region
        $region21: #{t_d_layer_forward.3} parent=11 // pred_check
          %p239 = pneg %p192
        $region22: #{t_d_layer_forward.3} parent=11 // pred_check_branch
          %241 = sbr.rel (%p239) target = $region24
        $region23: #{t_d_layer_forward.3} parent=11 // pred_region
          _
        $region24: #{t_d_layer_forward.3} parent=11 // pred_fallthru
          _
      $region12: #{t_d_layer_forward.3} parent=5 // pred_fallthru
        _
      %p242 = scmp.lt.s32.totalorder %s13, 4
      // Predicated region
      $region25: #{t_d_layer_forward.3} parent=5 // pred_check
        %p243 = pneg %p242
      $region26: #{t_d_layer_forward.3} parent=5 // pred_check_branch
        %245 = sbr.rel (%p243) target = $region28
      $region27: #{t_d_layer_forward.3} parent=5 // pred_region
        // Predicated region
        $region29: #{t_d_layer_forward.3} parent=27 // pred_check
          %p246 = pneg %p45
        $region30: #{t_d_layer_forward.3} parent=27 // pred_check_branch
          %248 = sbr.rel (%p246) target = $region32
        $region31: #{t_d_layer_forward.3} parent=27 // pred_region
          %s249 = smul.u32 4, %s20
          %p250 = scmp.lt.s32.totalorder %s249, 7
          %s251 = scalar_select %p250, %s249, 7
          %s252 = smul.addr %s251, 4
          %s253 = scalar_lea.vmem %s0, %s252
          %s254 = smul.u32 4, %s20
        $region32: #{t_d_layer_forward.3} parent=27 // pred_fallthru
          _
        // Predicated region
        $region33: #{t_d_layer_forward.3} parent=27 // pred_check
          %p255 = pneg %p71
        $region34: #{t_d_layer_forward.3} parent=27 // pred_check_branch
          %257 = sbr.rel (%p255) target = $region36
        $region35: #{t_d_layer_forward.3} parent=27 // pred_region
          %s258 = smul.u32 16, %s21
          %p259 = scmp.lt.s32.totalorder %s258, 31
          %s260 = scalar_select %p259, %s258, 31
          %s261 = smul.addr %s260, 4
          %s262 = scalar_lea.vmem %s1, %s261
          %s263 = smul.u32 16, %s21
        $region36: #{t_d_layer_forward.3} parent=27 // pred_fallthru
          _
        // Predicated region
        $region37: #{t_d_layer_forward.3} parent=27 // pred_check
          %p264 = pneg %p97
        $region38: #{t_d_layer_forward.3} parent=27 // pred_check_branch
          %266 = sbr.rel (%p264) target = $region40
        $region39: #{t_d_layer_forward.3} parent=27 // pred_region
          %p267 = scmp.lt.s32.totalorder %s21, 1
          %s268 = scalar_select %p267, %s21, 1
          %s269 = scalar_lea.vmem %s2, %s268
        $region40: #{t_d_layer_forward.3} parent=27 // pred_fallthru
          _
        // Predicated region
        $region41: #{t_d_layer_forward.3} parent=27 // pred_check
          %p270 = pneg %p123
        $region42: #{t_d_layer_forward.3} parent=27 // pred_check_branch
          %272 = sbr.rel (%p270) target = $region44
        $region43: #{t_d_layer_forward.3} parent=27 // pred_region
          %s273 = sand.u32 %s113, 1
          %s274 = sand.u32 %s113, 1
          %s275 = smul.addr %s274, 16
          %s276 = scalar_lea.vmem [#allocation3], %s275
          %s277 = smul.addr %s21, 4
          %s278 = scalar_lea.vmem %s3, %s277
          // Predicated region
          $region45: #{t_d_layer_forward.3} parent=43 // pred_check
            _
          $region46: #{t_d_layer_forward.3} parent=43 // pred_check_branch
            %280 = sbr.rel (0) target = $region48
          $region47: #{t_d_layer_forward.3} parent=43 // pred_region
            // Predicated region
            $region49: #{t_d_layer_forward.3} parent=47 // pred_check
              _
            $region50: #{t_d_layer_forward.3} parent=47 // pred_check_branch
              %282 = sbr.rel target = $region52
            $region51: #{t_d_layer_forward.3} parent=47 // pred_region
              // Predicated region
              $region64: #{t_d_layer_forward.3} parent=51 // pred_check
                _
              $region65: #{t_d_layer_forward.3} parent=51 // pred_check_branch
                %304 = sbr.rel (0) target = $region67
              $region66: #{t_d_layer_forward.3} parent=51 // pred_region
                loop: start=0, step=1, limit=1
                $region68: #{t_d_layer_forward.3} parent=66 // loop_pre_header
                  _
                $region69: #{t_d_layer_forward.3} parent=66 // loop_header
                  %s306 = sphi 0, %s310
                  %p307 = scmp.ge.s32.totalorder %s306, 1
                  %s311 = sphi %s278, %s278
                  %s312 = sphi %s276, %s276
                $region70: #{t_d_layer_forward.3} parent=66 // loop_header_branch
                  %309 = sbr.rel (%p307) target = $region74
                $region71: #{t_d_layer_forward.3} parent=66 // loop_body
                  _
                $region72: #{t_d_layer_forward.3} parent=66 // loop_footer
                  %s310 = sadd.s32 1, %s306
                $region73: #{t_d_layer_forward.3} parent=66 // loop_footer_branch
                  %305 = sbr.rel target = $region69
                $region74: #{t_d_layer_forward.3} parent=66 // loop_exit
                  _
                %s314 = ssub.s32 16, 1
                loop: start=0, step=1, limit=1
                $region75: #{t_d_layer_forward.3} parent=66 // loop_pre_header
                  _
                $region76: #{t_d_layer_forward.3} parent=66 // loop_header
                  %s316 = sphi 0, %s320
                  %p317 = scmp.ge.s32.totalorder %s316, 1
                  %s321 = sphi %s278, %s278
                  %s322 = sphi %s276, %s276
                $region77: #{t_d_layer_forward.3} parent=66 // loop_header_branch
                  %319 = sbr.rel (%p317) target = $region81
                $region78: #{t_d_layer_forward.3} parent=66 // loop_body
                  %v323 = vld [vmem:[%s321] sm:%s314]
                  %324 = vst [vmem:[%s322] sm:%s314] %v323
                  %v325 = vld [vmem:[%s321 + $0x8] sm:%s314]
                  %326 = vst [vmem:[%s322 + $0x4] sm:%s314] %v325
                  %v327 = vld [vmem:[%s321 + $0x10] sm:%s314]
                  %328 = vst [vmem:[%s322 + $0x8] sm:%s314] %v327
                  %v329 = vld [vmem:[%s321 + $0x18] sm:%s314]
                  %330 = vst [vmem:[%s322 + $0xc] sm:%s314] %v329
                $region79: #{t_d_layer_forward.3} parent=66 // loop_footer
                  %s320 = sadd.s32 1, %s316
                $region80: #{t_d_layer_forward.3} parent=66 // loop_footer_branch
                  %315 = sbr.rel target = $region76
                $region81: #{t_d_layer_forward.3} parent=66 // loop_exit
                  _
              $region67: #{t_d_layer_forward.3} parent=51 // pred_fallthru
                _
            $region52: #{t_d_layer_forward.3} parent=47 // pred_fallthru
              _
            // Predicated region
            $region53: #{t_d_layer_forward.3} parent=47 // pred_check
              _
            $region54: #{t_d_layer_forward.3} parent=47 // pred_check_branch
              %284 = sbr.rel (0) target = $region56
            $region55: #{t_d_layer_forward.3} parent=47 // pred_region
              %s286 = ssub.s32 16, 1
              loop: start=0, step=1, limit=1
              $region57: #{t_d_layer_forward.3} parent=55 // loop_pre_header
                _
              $region58: #{t_d_layer_forward.3} parent=55 // loop_header
                %s288 = sphi 0, %s292
                %p289 = scmp.ge.s32.totalorder %s288, 1
                %s293 = sphi %s278, %s278
                %s294 = sphi %s276, %s276
              $region59: #{t_d_layer_forward.3} parent=55 // loop_header_branch
                %291 = sbr.rel (%p289) target = $region63
              $region60: #{t_d_layer_forward.3} parent=55 // loop_body
                %v295 = vld [vmem:[%s293] sm:%s286]
                %296 = vst [vmem:[%s294] sm:%s286] %v295
                %v297 = vld [vmem:[%s293 + $0x8] sm:%s286]
                %298 = vst [vmem:[%s294 + $0x4] sm:%s286] %v297
                %v299 = vld [vmem:[%s293 + $0x10] sm:%s286]
                %300 = vst [vmem:[%s294 + $0x8] sm:%s286] %v299
                %v301 = vld [vmem:[%s293 + $0x18] sm:%s286]
                %302 = vst [vmem:[%s294 + $0xc] sm:%s286] %v301
              $region61: #{t_d_layer_forward.3} parent=55 // loop_footer
                %s292 = sadd.s32 1, %s288
              $region62: #{t_d_layer_forward.3} parent=55 // loop_footer_branch
                %287 = sbr.rel target = $region58
              $region63: #{t_d_layer_forward.3} parent=55 // loop_exit
                _
            $region56: #{t_d_layer_forward.3} parent=47 // pred_fallthru
              _
          $region48: #{t_d_layer_forward.3} parent=43 // pred_fallthru
            _
          %331 = vnop
        $region44: #{t_d_layer_forward.3} parent=27 // pred_fallthru
          _
      $region28: #{t_d_layer_forward.3} parent=5 // pred_fallthru
        _
      %p332 = scmp.le.s32.totalorder 1, %s13
      %p333 = scmp.lt.s32.totalorder %s13, 5
      %p334 = pnand %p332, %p333
      %p335 = pneg %p334
      // Predicated region
      $region82: #{t_d_layer_forward.3} parent=5 // pred_check
        _
      $region83: #{t_d_layer_forward.3} parent=5 // pred_check_branch
        %337 = sbr.rel (%p334) target = $region85
      $region84: #{t_d_layer_forward.3} parent=5 // pred_region
        %s338 = ssub.s32 %s13, 1
        %s339 = sand.u32 %s116, 1
        %s340 = sand.u32 %s116, 1
        %s341 = smul.addr %s340, 16
        %s342 = scalar_lea.vmem [#allocation3], %s341
        // Predicated region
        $region86: #{t_d_layer_forward.3} parent=84 // pred_check
          %p343 = pneg %p129
        $region87: #{t_d_layer_forward.3} parent=84 // pred_check_branch
          %345 = sbr.rel (%p343) target = $region89
        $region88: #{t_d_layer_forward.3} parent=84 // pred_region
          _
        $region89: #{t_d_layer_forward.3} parent=84 // pred_fallthru
          _
        %s346 = smul.u32 4, %s22
        %p347 = scmp.lt.s32.totalorder %s346, 7
        %s348 = scalar_select %p347, %s346, 7
        %s349 = smul.addr %s348, 4
        %s350 = scalar_lea.vmem %s0, %s349
        %p351 = pneg %p51
        %p352 = pneg %p48
        %s353 = smul.u32 16, %s23
        %p354 = scmp.lt.s32.totalorder %s353, 31
        %s355 = scalar_select %p354, %s353, 31
        %s356 = smul.addr %s355, 4
        %s357 = scalar_lea.vmem %s1, %s356
        %p358 = pneg %p77
        %p359 = pneg %p74
        %p360 = scmp.lt.s32.totalorder %s23, 1
        %s361 = scalar_select %p360, %s23, 1
        %s362 = scalar_lea.vmem %s2, %s361
        %p363 = pneg %p103
        %p364 = pneg %p100
        %s365 = sand.u32 %s116, 1
        %s366 = sand.u32 %s116, 1
        %s367 = smul.addr %s366, 16
        %s368 = scalar_lea.vmem [#allocation3], %s367
        %p369 = pneg %p129
        %p370 = pneg %p126
        %p371 = pneg %p150
        %p372 = pneg %p147
        %p373 = pneg %p171
        %p374 = pneg %p168
        %p375 = pneg %p192
        %p376 = pneg %p189
        %p377 = pneg %p218
        %p378 = pneg %p215
        %s379 = smul.u32 4, %s22
        %p380 = scmp.lt.s32.totalorder %s379, 7
        %s381 = scalar_select %p380, %s379, 7
        %s382 = smul.addr %s381, 8
        %s383 = scalar_lea.vmem %s7, %s382
        %s384 = smul.u32 4, %s22
        %p385 = scmp.lt.s32.totalorder %s384, 7
        %s386 = scalar_select %p385, %s384, 7
        %s387 = smul.addr %s386, 4
        %s388 = scalar_lea.vmem %s0, %s387
        %s389 = smul.u32 4, %s22
        %s390 = smul.u32 16, %s23
        %p391 = scmp.lt.s32.totalorder %s390, 31
        %s392 = scalar_select %p391, %s390, 31
        %s393 = smul.addr %s392, 4
        %s394 = scalar_lea.vmem %s1, %s393
        %s395 = smul.u32 16, %s23
        %p396 = scmp.lt.s32.totalorder %s23, 1
        %s397 = scalar_select %p396, %s23, 1
        %s398 = scalar_lea.vmem %s2, %s397
        %s399 = smul.u32 4, %s22
        %p400 = scmp.lt.s32.totalorder %s399, 7
        %s401 = scalar_select %p400, %s399, 7
        %s402 = smul.addr %s401, 8
        %s403 = scalar_lea.vmem %s7, %s402
        %s404 = smul.u32 4, %s22
        %p406 = scmp.eq.s32.totalorder %s23, 0
        // Predicated region
        $region90: #{t_d_layer_forward.3} parent=84 // pred_check
          %p407 = pneg %p406
        $region91: #{t_d_layer_forward.3} parent=84 // pred_check_branch
          %409 = sbr.rel (%p407) target = $region93
        $region92: #{t_d_layer_forward.3} parent=84 // pred_region
          %vm410 = vcmask 261120
          %411 = vst.msk [vmem:[#allocation2] sm:$0xff] %vm410, 0.0
          %412 = vst.msk [vmem:[#allocation2 + $0x8] sm:$0xff] %vm410, 0.0
          %413 = vst.msk [vmem:[#allocation2 + $0x10] sm:$0xff] %vm410, 0.0
          %414 = vst.msk [vmem:[#allocation2 + $0x18] sm:$0xff] %vm410, 0.0
        $region93: #{t_d_layer_forward.3} parent=84 // pred_fallthru
          _
        %v415 = vld [vmem:[%s388] sm:$0xf]
        %v416 = vld [vmem:[%s388 + $0x4] sm:$0xf]
        %v417 = vld [vmem:[%s388 + $0x8] sm:$0xf]
        %v418 = vld [vmem:[%s388 + $0xc] sm:$0xf]
        %v419 = vld [vmem:[%s394] sm:$0xf]
        %v420 = vld [vmem:[%s394 + $0x4] sm:$0xf]
        %v421 = vld [vmem:[%s394 + $0x8] sm:$0xf]
        %v422 = vld [vmem:[%s394 + $0xc] sm:$0xf]
        %v423 = vld [vmem:[%s394 + $0x10] sm:$0xf]
        %v424 = vld [vmem:[%s394 + $0x14] sm:$0xf]
        %v425 = vld [vmem:[%s394 + $0x18] sm:$0xf]
        %v426 = vld [vmem:[%s394 + $0x1c] sm:$0xf]
        %v427 = vld [vmem:[%s394 + $0x20] sm:$0xf]
        %v428 = vld [vmem:[%s394 + $0x24] sm:$0xf]
        %v429 = vld [vmem:[%s394 + $0x28] sm:$0xf]
        %v430 = vld [vmem:[%s394 + $0x2c] sm:$0xf]
        %v431 = vld [vmem:[%s394 + $0x30] sm:$0xf]
        %v432 = vld [vmem:[%s394 + $0x34] sm:$0xf]
        %v433 = vld [vmem:[%s394 + $0x38] sm:$0xf]
        %v434 = vld [vmem:[%s394 + $0x3c] sm:$0xf]
        %v435 = vld [vmem:[%s398] sm:$0x1]
        %v437 = vlaneseq
        %v438 = vshrl.u32 %v437, 7
        %v439 = vsub.s32 0, %v438
        %v440 = vrot.slane %v435, %v439
        %v446 = vunpack.c.l.b16 %v415
        %v447 = vunpack.c.l.b16 %v416
        %v448 = vunpack.c.l.b16 %v417
        %v449 = vunpack.c.l.b16 %v418
        %v450 = vpack.c.b16 %v447, %v446
        %v451 = vpack.c.b16 %v449, %v448
        %v468 = vunpack.c.l.b16 %v419
        %v469 = vunpack.c.l.b16 %v420
        %v470 = vunpack.c.l.b16 %v421
        %v471 = vunpack.c.l.b16 %v422
        %v472 = vunpack.c.l.b16 %v423
        %v473 = vunpack.c.l.b16 %v424
        %v474 = vunpack.c.l.b16 %v425
        %v475 = vunpack.c.l.b16 %v426
        %v476 = vunpack.c.l.b16 %v427
        %v477 = vunpack.c.l.b16 %v428
        %v478 = vunpack.c.l.b16 %v429
        %v479 = vunpack.c.l.b16 %v430
        %v480 = vunpack.c.l.b16 %v431
        %v481 = vunpack.c.l.b16 %v432
        %v482 = vunpack.c.l.b16 %v433
        %v483 = vunpack.c.l.b16 %v434
        %v484 = vpack.c.b16 %v469, %v468
        %v485 = vpack.c.b16 %v471, %v470
        %v486 = vpack.c.b16 %v473, %v472
        %v487 = vpack.c.b16 %v475, %v474
        %v488 = vpack.c.b16 %v477, %v476
        %v489 = vpack.c.b16 %v479, %v478
        %v490 = vpack.c.b16 %v481, %v480
        %v491 = vpack.c.b16 %v483, %v482
        %vm492 = vcmask 261120
        %v494 = vsel %vm492, %v450, 0
        %v497 = vsel %vm492, %v451, 0
        %v500 = vsel %vm492, %v484, 0
        %v503 = vsel %vm492, %v485, 0
        %v506 = vsel %vm492, %v486, 0
        %v509 = vsel %vm492, %v487, 0
        %v512 = vsel %vm492, %v488, 0
        %v515 = vsel %vm492, %v489, 0
        %v518 = vsel %vm492, %v490, 0
        %v521 = vsel %vm492, %v491, 0
        %523 = vmatprep.subr.bf16.mxu0 0
        %524 = vmatpush1.bf16.xpose.msra.mxu0 %v521
        %525 = vmatprep.subr.bf16.mxu0 0
        %526 = vmatpush1.bf16.xpose.msra.mxu0 %v518
        %527 = vmatprep.subr.bf16.mxu0 0
        %528 = vmatpush1.bf16.xpose.msra.mxu0 %v515
        %529 = vmatprep.subr.bf16.mxu0 0
        %530 = vmatpush1.bf16.xpose.msra.mxu0 %v512
        %531 = vmatprep.subr.bf16.mxu0 0
        %532 = vmatpush1.bf16.xpose.msra.mxu0 %v509
        %533 = vmatprep.subr.bf16.mxu0 0
        %534 = vmatpush1.bf16.xpose.msra.mxu0 %v506
        %535 = vmatprep.subr.bf16.mxu0 0
        %536 = vmatpush1.bf16.xpose.msra.mxu0 %v503
        %537 = vmatprep.subr.bf16.mxu0 0
        %538 = vmatpush1.bf16.xpose.msra.mxu0 %v500
        %539 = vmatprep.subr.bf16.mxu0 0
        %540 = vmatpush2.bf16.xpose.msra.mxu0 0
        %541 = vmatprep.subr.bf16.mxu0 0
        %542 = vmatpush2.bf16.xpose.msra.mxu0 0
        %543 = vmatprep.subr.bf16.mxu0 0
        %544 = vmatpush2.bf16.xpose.msra.mxu0 0
        %545 = vmatprep.subr.bf16.mxu0 0
        %546 = vmatpush2.bf16.xpose.msra.mxu0 0
        %547 = vmatprep.subr.bf16.mxu0 0
        %548 = vmatpush2.bf16.xpose.msra.mxu0 0
        %549 = vmatprep.subr.bf16.mxu0 0
        %550 = vmatpush2.bf16.xpose.msra.mxu0 0
        %551 = vmatprep.subr.bf16.mxu0 0
        %552 = vmatpush2.bf16.xpose.msra.mxu0 0
        %553 = vmatprep.subr.bf16.mxu0 0
        %554 = vmatpush2.bf16.xpose.msra.mxu0 0
        %555 = vmatprep.mubr.bf16.mxu0 0
        %556 = vmatmul.mubr.bf16.gmra.mxu0 %v494
        %v557 = vpop.f32.mrf.mxu0
        %v558 = vadd.f32 %v440, %v557
        %v559 = vpop.f32.mrf.mxu0
        %v560 = vpop.f32.mrf.mxu0
        %v561 = vadd.f32 %v440, %v560
        %v562 = vpop.f32.mrf.mxu0
        %563 = vmatprep.mubr.bf16.mxu0 0
        %564 = vmatmul.mubr.bf16.gmra.mxu0 %v497
        %v565 = vpop.f32.mrf.mxu0
        %v566 = vadd.f32 %v440, %v565
        %v567 = vpop.f32.mrf.mxu0
        %v568 = vpop.f32.mrf.mxu0
        %v569 = vadd.f32 %v440, %v568
        %v570 = vpop.f32.mrf.mxu0
        %571 = vdwg.mxu0
        %v572 = vmax.f32 %v558, 0.0
        %v573 = vmax.f32 %v561, 0.0
        %v574 = vmax.f32 %v566, 0.0
        %v575 = vmax.f32 %v569, 0.0
        %v576 = vld [vmem:[#allocation2] sm:$0xff]
        %v577 = vld [vmem:[#allocation2 + $0x8] sm:$0xff]
        %v578 = vld [vmem:[#allocation2 + $0x10] sm:$0xff]
        %v579 = vld [vmem:[#allocation2 + $0x18] sm:$0xff]
        %v580 = vpack.c.bf16 %v573, %v572
        %v581 = vpack.c.bf16 %v575, %v574
        %v582 = vld [vmem:[%s342] sm:$0xf]
        %v583 = vld [vmem:[%s342 + $0x4] sm:$0xf]
        %v584 = vld [vmem:[%s342 + $0x8] sm:$0xf]
        %v585 = vld [vmem:[%s342 + $0xc] sm:$0xf]
        %v590 = vunpack.c.l.b16 %v582
        %v591 = vunpack.c.l.b16 %v583
        %v592 = vunpack.c.l.b16 %v584
        %v593 = vunpack.c.l.b16 %v585
        %v594 = vpack.c.b16 %v591, %v590
        %v595 = vpack.c.b16 %v593, %v592
        %598 = vmatprep.subr.bf16.mxu0 0
        %599 = vmatpush1.bf16.xpose.msra.mxu0 0
        %600 = vmatprep.subr.bf16.mxu0 0
        %601 = vmatpush1.bf16.xpose.msra.mxu0 0
        %602 = vmatprep.subr.bf16.mxu0 0
        %603 = vmatpush1.bf16.xpose.msra.mxu0 0
        %604 = vmatprep.subr.bf16.mxu0 0
        %605 = vmatpush1.bf16.xpose.msra.mxu0 0
        %606 = vmatprep.subr.bf16.mxu0 0
        %607 = vmatpush1.bf16.xpose.msra.mxu0 0
        %608 = vmatprep.subr.bf16.mxu0 0
        %609 = vmatpush1.bf16.xpose.msra.mxu0 0
        %610 = vmatprep.subr.bf16.mxu0 0
        %611 = vmatpush1.bf16.xpose.msra.mxu0 %v595
        %612 = vmatprep.subr.bf16.mxu0 0
        %613 = vmatpush1.bf16.xpose.msra.mxu0 %v594
        %614 = vmatprep.subr.bf16.mxu0 0
        %615 = vmatpush2.bf16.xpose.msra.mxu0 0
        %616 = vmatprep.subr.bf16.mxu0 0
        %617 = vmatpush2.bf16.xpose.msra.mxu0 0
        %618 = vmatprep.subr.bf16.mxu0 0
        %619 = vmatpush2.bf16.xpose.msra.mxu0 0
        %620 = vmatprep.subr.bf16.mxu0 0
        %621 = vmatpush2.bf16.xpose.msra.mxu0 0
        %622 = vmatprep.subr.bf16.mxu0 0
        %623 = vmatpush2.bf16.xpose.msra.mxu0 0
        %624 = vmatprep.subr.bf16.mxu0 0
        %625 = vmatpush2.bf16.xpose.msra.mxu0 0
        %626 = vmatprep.subr.bf16.mxu0 0
        %627 = vmatpush2.bf16.xpose.msra.mxu0 0
        %628 = vmatprep.subr.bf16.mxu0 0
        %629 = vmatpush2.bf16.xpose.msra.mxu0 0
        %630 = vmatprep.mubr.bf16.mxu0 0
        %631 = vmatmul.mubr.bf16.gmra.mxu0 %v580
        %v632 = vpop.f32.mrf.mxu0
        %v633 = vadd.f32 0.0, %v632
        %v634 = vpop.f32.mrf.mxu0
        %v635 = vpop.f32.mrf.mxu0
        %v636 = vadd.f32 0.0, %v635
        %v637 = vpop.f32.mrf.mxu0
        %638 = vmatprep.mubr.bf16.mxu0 0
        %639 = vmatmul.mubr.bf16.gmra.mxu0 %v581
        %v640 = vpop.f32.mrf.mxu0
        %v641 = vadd.f32 0.0, %v640
        %v642 = vpop.f32.mrf.mxu0
        %v643 = vpop.f32.mrf.mxu0
        %v644 = vadd.f32 0.0, %v643
        %v645 = vpop.f32.mrf.mxu0
        %646 = vdwg.mxu0
        %v647 = vadd.f32 %v576, %v633
        %v648 = vadd.f32 %v577, %v636
        %v649 = vadd.f32 %v578, %v641
        %v650 = vadd.f32 %v579, %v644
        %651 = vst.msk [vmem:[#allocation2] sm:$0xff] %vm492, %v647
        %652 = vst.msk [vmem:[#allocation2 + $0x8] sm:$0xff] %vm492, %v648
        %653 = vst.msk [vmem:[#allocation2 + $0x10] sm:$0xff] %vm492, %v649
        %654 = vst.msk [vmem:[#allocation2 + $0x18] sm:$0xff] %vm492, %v650
        %p655 = scmp.eq.s32.totalorder %s23, 1
        // Predicated region
        $region94: #{t_d_layer_forward.3} parent=84 // pred_check
          %p656 = pneg %p655
        $region95: #{t_d_layer_forward.3} parent=84 // pred_check_branch
          %658 = sbr.rel (%p656) target = $region97
        $region96: #{t_d_layer_forward.3} parent=84 // pred_region
          %v659 = vld [vmem:[#allocation2] sm:$0xff]
          %v660 = vld [vmem:[#allocation2 + $0x8] sm:$0xff]
          %v661 = vld [vmem:[#allocation2 + $0x10] sm:$0xff]
          %v662 = vld [vmem:[#allocation2 + $0x18] sm:$0xff]
          %v663 = vld [vmem:[%s4] sm:$0x1]
          %v665 = vlaneseq
          %v666 = vshrl.u32 %v665, 7
          %v667 = vsub.s32 0, %v666
          %v668 = vrot.slane %v663, %v667
          %v670 = vadd.f32 %v659, %v668
          %v671 = vadd.f32 %v660, %v668
          %v672 = vadd.f32 %v661, %v668
          %v673 = vadd.f32 %v662, %v668
          %v674 = vld [vmem:[%s388] sm:$0xf]
          %v675 = vld [vmem:[%s388 + $0x4] sm:$0xf]
          %v676 = vld [vmem:[%s388 + $0x8] sm:$0xf]
          %v677 = vld [vmem:[%s388 + $0xc] sm:$0xf]
          %v678 = vunpack.c.l.bf16 %v674
          %v679 = vunpack.c.l.bf16 %v675
          %v680 = vunpack.c.l.bf16 %v676
          %v681 = vunpack.c.l.bf16 %v677
          %v682 = vadd.f32 %v670, %v678
          %v683 = vadd.f32 %v671, %v679
          %v684 = vadd.f32 %v672, %v680
          %v685 = vadd.f32 %v673, %v681
          %v686 = vsel %vm492, %v682, 0.0
          %687 = vadd.xlane.f32.xlu0 %v686
          %v688 = vpop.xlane.xlu0 %687
          %v689 = vsel %vm492, %v683, 0.0
          %690 = vadd.xlane.f32.xlu0 %v689
          %v691 = vpop.xlane.xlu0 %690
          %v692 = vsel %vm492, %v684, 0.0
          %693 = vadd.xlane.f32.xlu0 %v692
          %v694 = vpop.xlane.xlu0 %693
          %v695 = vsel %vm492, %v685, 0.0
          %696 = vadd.xlane.f32.xlu0 %v695
          %v697 = vpop.xlane.xlu0 %696
          %v698 = vrcp.pop 32.0
          %v699 = vmul.f32 %v688, %v698
          %v700 = vmul.f32 %v691, %v698
          %v701 = vmul.f32 %v694, %v698
          %v702 = vmul.f32 %v697, %v698
          %v703 = vsub.f32 %v682, %v699
          %v704 = vsub.f32 %v683, %v700
          %v705 = vsub.f32 %v684, %v701
          %v706 = vsub.f32 %v685, %v702
          %v707 = vmul.f32 %v703, %v703
          %v708 = vmul.f32 %v704, %v704
          %v709 = vmul.f32 %v705, %v705
          %v710 = vmul.f32 %v706, %v706
          %v711 = vsel %vm492, %v707, 0.0
          %712 = vadd.xlane.f32.xlu0 %v711
          %v713 = vpop.xlane.xlu0 %712
          %v714 = vsel %vm492, %v708, 0.0
          %715 = vadd.xlane.f32.xlu0 %v714
          %v716 = vpop.xlane.xlu0 %715
          %v717 = vsel %vm492, %v709, 0.0
          %718 = vadd.xlane.f32.xlu0 %v717
          %v719 = vpop.xlane.xlu0 %718
          %v720 = vsel %vm492, %v710, 0.0
          %721 = vadd.xlane.f32.xlu0 %v720
          %v722 = vpop.xlane.xlu0 %721
          %v723 = vmul.f32 %v713, %v698
          %v724 = vmul.f32 %v716, %v698
          %v725 = vmul.f32 %v719, %v698
          %v726 = vmul.f32 %v722, %v698
          %v727 = vadd.f32 %v723, 1e-05
          %v728 = vadd.f32 %v724, 1e-05
          %v729 = vadd.f32 %v725, 1e-05
          %v730 = vadd.f32 %v726, 1e-05
          %v731 = vrsqrt.pop %v727
          %v732 = vrsqrt.pop %v728
          %v733 = vrsqrt.pop %v729
          %v734 = vrsqrt.pop %v730
          %v735 = vmul.f32 %v703, %v731
          %v736 = vmul.f32 %v704, %v732
          %v737 = vmul.f32 %v705, %v733
          %v738 = vmul.f32 %v706, %v734
          %v739 = vld [vmem:[%s5] sm:$0x1]
          %v741 = vlaneseq
          %v742 = vshrl.u32 %v741, 7
          %v743 = vsub.s32 0, %v742
          %v744 = vrot.slane %v739, %v743
          %v746 = vmul.f32 %v735, %v744
          %v747 = vmul.f32 %v736, %v744
          %v748 = vmul.f32 %v737, %v744
          %v749 = vmul.f32 %v738, %v744
          %v750 = vld [vmem:[%s6] sm:$0x1]
          %v752 = vlaneseq
          %v753 = vshrl.u32 %v752, 7
          %v754 = vsub.s32 0, %v753
          %v755 = vrot.slane %v750, %v754
          %v757 = vadd.f32 %v746, %v755
          %v758 = vadd.f32 %v747, %v755
          %v759 = vadd.f32 %v748, %v755
          %v760 = vadd.f32 %v749, %v755
          %761 = vst.msk [vmem:[%s403] sm:$0xff] %vm492, %v757
          %762 = vst.msk [vmem:[%s403 + $0x8] sm:$0xff] %vm492, %v758
          %763 = vst.msk [vmem:[%s403 + $0x10] sm:$0xff] %vm492, %v759
          %764 = vst.msk [vmem:[%s403 + $0x18] sm:$0xff] %vm492, %v760
        $region97: #{t_d_layer_forward.3} parent=84 // pred_fallthru
          _
        %s765 = smul.u32 4, %s22
        %p766 = scmp.lt.s32.totalorder %s765, 7
        %s767 = scalar_select %p766, %s765, 7
        %s768 = smul.addr %s767, 8
        %s769 = scalar_lea.vmem %s7, %s768
        // Predicated region
        $region98: #{t_d_layer_forward.3} parent=84 // pred_check
          %p770 = pneg %p215
        $region99: #{t_d_layer_forward.3} parent=84 // pred_check_branch
          %772 = sbr.rel (%p770) target = $region101
        $region100: #{t_d_layer_forward.3} parent=84 // pred_region
          %s773 = smul.u32 4, %s22
        $region101: #{t_d_layer_forward.3} parent=84 // pred_fallthru
          _
      $region85: #{t_d_layer_forward.3} parent=5 // pred_fallthru
        _
      %p774 = scmp.le.s32.totalorder 2, %s13
      // Predicated region
      $region102: #{t_d_layer_forward.3} parent=5 // pred_check
        %p775 = pneg %p774
      $region103: #{t_d_layer_forward.3} parent=5 // pred_check_branch
        %777 = sbr.rel (%p775) target = $region105
      $region104: #{t_d_layer_forward.3} parent=5 // pred_region
        %s778 = ssub.s32 %s13, 2
        // Predicated region
        $region106: #{t_d_layer_forward.3} parent=104 // pred_check
          %p779 = pneg %p221
        $region107: #{t_d_layer_forward.3} parent=104 // pred_check_branch
          %781 = sbr.rel (%p779) target = $region109
        $region108: #{t_d_layer_forward.3} parent=104 // pred_region
          %s782 = smul.u32 4, %s24
          %p783 = scmp.lt.s32.totalorder %s782, 7
          %s784 = scalar_select %p783, %s782, 7
          %s785 = smul.addr %s784, 8
          %s786 = scalar_lea.vmem %s7, %s785
        $region109: #{t_d_layer_forward.3} parent=104 // pred_fallthru
          _
      $region105: #{t_d_layer_forward.3} parent=5 // pred_fallthru
        _
    $region6: #{t_d_layer_forward.3} parent=1 // loop_footer
      %s17 = sadd.s32 1, %s13
    $region7: #{t_d_layer_forward.3} parent=1 // loop_footer_branch
      %12 = sbr.rel target = $region3
    $region8: #{t_d_layer_forward.3} parent=1 // loop_exit
      _

</llo_original>
